<compile_context>
chip_gen: v7x
topology: tpu7x:2x2x1
jax: 0.10.0
libtpu: 0.0.40
codegen_flags: <defaults>
</compile_context>

<pallas_src>
import jax
import jax.numpy as jnp
from jax.experimental import pallas as pl
from jax.experimental.pallas import tpu as pltpu


def _se_gate_conv1x1_kernel(x_ref, g_ref, w_ref, o_ref):
    # x_ref: (Cin, HW)        activations (replicated across Cout blocks)
    # g_ref: (Cin, 1)         pre-sigmoid gate
    # w_ref: (CB,  Cin)       weight block for this grid step (bf16 or f32)
    # o_ref: (CB,  HW)        output block
    gate = jax.nn.sigmoid(g_ref[...].astype(jnp.float32))        # EUP, f32
    xg = x_ref[...].astype(jnp.float32) * gate                   # VPU, f32, lane-bcast
    xg_bf16 = xg.astype(jnp.bfloat16)                            # MXU operand
    w_bf16 = w_ref[...].astype(jnp.bfloat16)
    o_ref[...] = jnp.dot(
        w_bf16, xg_bf16, preferred_element_type=jnp.float32      # f32 accumulate
    ).astype(o_ref.dtype)


def sigmoid_mul_conv1x1(x_nchw, gate_nc11, weight_oi11, *, cout_block=None):
    """x_nchw: (1, Cin, H, W); gate_nc11: (1, Cin, 1, 1); weight: (Cout, Cin, 1, 1).

    Computes Conv2d_1x1(x * sigmoid(gate)) and returns (1, Cout, H, W).
    """
    N, Cin, H, W = x_nchw.shape
    Cout = weight_oi11.shape[0]
    assert N == 1, "kernel written for N=1 (as in the reference module)"
    HW = H * W

    # Split Cout so the two v7x TensorCores each get half the weight DMA.
    if cout_block is None:
        cout_block = Cout // 2 if (Cout % 2 == 0 and (Cout // 2) % 8 == 0) else Cout
    assert Cout % cout_block == 0 and cout_block % 8 == 0
    n_blocks = Cout // cout_block

    # All three rearrangements below are free contiguous reshapes/slices.
    x2d = x_nchw[0].reshape(Cin, HW)              # (Cin, HW)
    g2d = gate_nc11[0, :, 0, 0].reshape(Cin, 1)   # (Cin, 1)
    w2d = weight_oi11[:, :, 0, 0]                 # (Cout, Cin) -- no transpose

    out2d = pl.pallas_call(
        _se_gate_conv1x1_kernel,
        out_shape=jax.ShapeDtypeStruct((Cout, HW), x_nchw.dtype),
        grid=(n_blocks,),
        in_specs=[
            pl.BlockSpec((Cin, HW), lambda i: (0, 0)),          # replicated
            pl.BlockSpec((Cin, 1), lambda i: (0, 0)),           # replicated
            pl.BlockSpec((cout_block, Cin), lambda i: (i, 0)),  # per-block weight
        ],
        out_specs=pl.BlockSpec((cout_block, HW), lambda i: (i, 0)),
        compiler_params=pltpu.CompilerParams(
            dimension_semantics=("parallel",),   # shards across v7x TensorCores
        ),
    )(x2d, g2d, w2d)

    # Free contiguous reshape back to NCHW.
    return out2d.reshape(1, Cout, H, W)


if __name__ == "__main__":
    # Shapes implied by the module's forward pass.
    N, Cin, H, W, Cout = 1, 1152, 7, 7, 320

    key = jax.random.PRNGKey(0)
    k1, k2, k3 = jax.random.split(key, 3)
    x226 = jax.random.normal(k1, (N, Cin, H, W), dtype=jnp.float32)
    x230 = jax.random.normal(k2, (N, Cin, 1, 1), dtype=jnp.float32)
    # Conv2d(1152, 320, 1x1, bias=False) weight, stored bf16 by the caller so
    # the kernel's dominant HBM read (the weight) is halved.
    weight = (
        jax.random.normal(k3, (Cout, Cin, 1, 1), dtype=jnp.float32) * 0.02
    ).astype(jnp.bfloat16)

    out = sigmoid_mul_conv1x1(x226, x230, weight)
    jax.block_until_ready(out)

    # Reference: f32 math using the same (bf16-rounded) weight values.
    gate = jax.nn.sigmoid(x230)
    xg = x226 * gate
    ref = jnp.einsum("nchw,oc->nohw", xg, weight[:, :, 0, 0].astype(jnp.float32))

    assert out.shape == (N, Cout, H, W)
    assert out.dtype == x226.dtype
    # bf16 matmul operands (f32 accumulation) => slightly looser tolerance.
    assert jnp.allclose(out, ref, atol=2e-2, rtol=2e-2), float(
        jnp.max(jnp.abs(out - ref))
    )

    print("KERNEL_OK")
</pallas_src>

<mosaic_0001>
module attributes {stable_mosaic.version = 11 : i64} {
  func.func @_se_gate_conv1x1_kernel(%arg0: i32, %arg1: memref<1152x49xf32, #tpu.memory_space<vmem>>, %arg2: memref<1152x1xf32, #tpu.memory_space<vmem>>, %arg3: memref<160x1152xbf16, #tpu.memory_space<vmem>>, %arg4: memref<160x49xf32, #tpu.memory_space<vmem>>) attributes {dimension_semantics = [#tpu.dimension_semantics<parallel>], iteration_bounds = array<i64: 2>, scalar_prefetch = 0 : i64, scratch_operands = 0 : i64, tpu.core_type = #tpu.core_type<tc>, window_params = [{pipeline_mode = #tpu.pipeline_mode<synchronous>, transform_indices = @transform_0, window_bounds = array<i64: 1152, 49>}, {pipeline_mode = #tpu.pipeline_mode<synchronous>, transform_indices = @transform_1, window_bounds = array<i64: 1152, 1>}, {transform_indices = @transform_2, window_bounds = array<i64: 160, 1152>}, {transform_indices = @transform_3, window_bounds = array<i64: 160, 49>}]} {
    %c0 = arith.constant 0 : index
    %c0_0 = arith.constant 0 : index
    %0 = vector.load %arg2[%c0, %c0_0] : memref<1152x1xf32, #tpu.memory_space<vmem>>, vector<1152x1xf32>
    %1 = arith.negf %0 : vector<1152x1xf32>
    %2 = math.exp %1 : vector<1152x1xf32>
    %cst = arith.constant 1.000000e+00 : f32
    %3 = vector.broadcast %cst : f32 to vector<1152x1xf32>
    %4 = arith.addf %3, %2 : vector<1152x1xf32>
    %5 = arith.divf %3, %4 : vector<1152x1xf32>
    %c0_1 = arith.constant 0 : index
    %c0_2 = arith.constant 0 : index
    %6 = vector.load %arg1[%c0_1, %c0_2] : memref<1152x49xf32, #tpu.memory_space<vmem>>, vector<1152x49xf32>
    %7 = vector.broadcast %5 : vector<1152x1xf32> to vector<1152x49xf32>
    %8 = arith.mulf %6, %7 : vector<1152x49xf32>
    %9 = arith.truncf %8 : vector<1152x49xf32> to vector<1152x49xbf16>
    %c0_3 = arith.constant 0 : index
    %c0_4 = arith.constant 0 : index
    %10 = vector.load %arg3[%c0_3, %c0_4] : memref<160x1152xbf16, #tpu.memory_space<vmem>>, vector<160x1152xbf16>
    %cst_5 = arith.constant dense<0.000000e+00> : vector<160x49xf32>
    %11 = tpu.matmul %10, %9, %cst_5 {dimension_numbers = #tpu.dot_dimension_numbers<[1], [0], [0], [1], [0, 0, 1, 1], [], []>} : vector<160x1152xbf16>, vector<1152x49xbf16>, vector<160x49xf32> -> vector<160x49xf32>
    %c0_6 = arith.constant 0 : index
    %c0_7 = arith.constant 0 : index
    %12 = vector.load %arg4[%c0_6, %c0_7] : memref<160x49xf32, #tpu.memory_space<vmem>>, vector<160x49xf32>
    tpu.vector_store %arg4[%c0_6, %c0_7], %11 {strides = array<i32>} : memref<160x49xf32, #tpu.memory_space<vmem>>, vector<160x49xf32>,
    return
  }
  func.func @transform_0(%arg0: i32) -> (i32, i32) {
    %c0_i32 = arith.constant 0 : i32
    %c0_i32_0 = arith.constant 0 : i32
    %c0_i32_1 = arith.constant 0 : i32
    return %c0_i32, %c0_i32_0 : i32, i32
  }
  func.func @transform_1(%arg0: i32) -> (i32, i32) {
    %c0_i32 = arith.constant 0 : i32
    %c0_i32_0 = arith.constant 0 : i32
    %c0_i32_1 = arith.constant 0 : i32
    return %c0_i32, %c0_i32_0 : i32, i32
  }
  func.func @transform_2(%arg0: i32) -> (i32, i32) {
    %c0_i32 = arith.constant 0 : i32
    %c0_i32_0 = arith.constant 0 : i32
    return %arg0, %c0_i32 : i32, i32
  }
  func.func @transform_3(%arg0: i32) -> (i32, i32) {
    %c0_i32 = arith.constant 0 : i32
    %c0_i32_0 = arith.constant 0 : i32
    return %arg0, %c0_i32 : i32, i32
  }
}

</mosaic_0001>

<llo_original>
// kernel: tpu_custom_call.1
$region0: #{tpu_custom_call.1}
  #allocation0 [shape = 'u32[]', space=smem, size = 0x4, offset = 0x4, fixed_abs, tag = 'smem constant byte address 0x4 - core index']
  #allocation1 [shape = 'u32[144,128]{1,0:T(1,128)}', space=vmem, size = 0x12000, scoped, tag = 'internal scratch']
  %s0 = inlined_call_operand.vmem [shape: f32[1152,49], index: 0, kind: input, shape index: {}]
  %s1 = inlined_call_operand.vmem [shape: f32[1152,1], index: 1, kind: input, shape index: {}]
  %s2 = inlined_call_operand.vmem [shape: bf16[320,1152], index: 2, kind: input, shape index: {}]
  %s3 = inlined_call_operand.vmem [shape: f32[320,49], index: 3, kind: output, shape index: {}]
  %s4 = sld [smem:[#allocation0]]
  $region45: #{tpu_custom_call.1} parent=0
    _
  %s6 = ssub.s32 1, %s4
  %s7 = scalar_select 0, %s6, %s4
  loop: start=0, step=1, limit=4
  $region2: #{tpu_custom_call.1} parent=0 // loop_pre_header
    _
  $region3: #{tpu_custom_call.1} parent=0 // loop_header
    %s9 = sphi 0, %s13
    %p10 = scmp.ge.s32.totalorder %s9, 4
    %s17 = sphi 0, %s17
    %s19 = sphi 0, %s17
    %s20 = sphi 0, %s19
    %s34 = sphi 0, %s20
    %s38 = sphi 0, %s38
    %s40 = sphi 0, %s38
    %s41 = sphi 0, %s40
    %s55 = sphi 0, %s41
    %s61 = sphi 0, %s63
    %s64 = sphi 0, %s61
    %s65 = sphi 0, %s64
    %s81 = sphi 0, %s65
    %s87 = sphi 0, %s89
    %s90 = sphi 0, %s87
    %s91 = sphi 0, %s90
    %s107 = sphi 0, %s91
  $region4: #{tpu_custom_call.1} parent=0 // loop_header_branch
    %12 = sbr.rel (%p10) target = $region8
  $region5: #{tpu_custom_call.1} parent=0 // loop_body
    %s14 = ssub.s32 %s9, 1
    %s15 = ssub.s32 %s9, 2
    %s16 = sadd.s32 %s9, 1
    %s18 = sadd.s32 %s17, 1
    %p21 = scmp.eq.s32.totalorder %s9, 1
    %p22 = scmp.ne.s32.totalorder %s17, %s19
    %p23 = scmp.eq.s32.totalorder %s9, 0
    %p24 = por %p22, %p23
    %p25 = scmp.ne.s32.totalorder %s17, %s19
    %p26 = scmp.eq.s32.totalorder %s14, 1
    %p27 = por %p25, %p26
    %p28 = scmp.ne.s32.totalorder %s19, %s20
    %p29 = scmp.eq.s32.totalorder %s14, 0
    %p30 = por %p28, %p29
    %p31 = scmp.ne.s32.totalorder %s19, %s20
    %p32 = scmp.eq.s32.totalorder %s15, 1
    %p33 = por %p31, %p32
    %p35 = scmp.ne.s32.totalorder %s20, %s34
    %p36 = scmp.eq.s32.totalorder %s15, 0
    %p37 = por %p35, %p36
    %s39 = sadd.s32 %s38, 1
    %p42 = scmp.eq.s32.totalorder %s9, 1
    %p43 = scmp.ne.s32.totalorder %s38, %s40
    %p44 = scmp.eq.s32.totalorder %s9, 0
    %p45 = por %p43, %p44
    %p46 = scmp.ne.s32.totalorder %s38, %s40
    %p47 = scmp.eq.s32.totalorder %s14, 1
    %p48 = por %p46, %p47
    %p49 = scmp.ne.s32.totalorder %s40, %s41
    %p50 = scmp.eq.s32.totalorder %s14, 0
    %p51 = por %p49, %p50
    %p52 = scmp.ne.s32.totalorder %s40, %s41
    %p53 = scmp.eq.s32.totalorder %s15, 1
    %p54 = por %p52, %p53
    %p56 = scmp.ne.s32.totalorder %s41, %s55
    %p57 = scmp.eq.s32.totalorder %s15, 0
    %p58 = por %p56, %p57
    %s59 = ssub.s32 %s9, %s16
    %p60 = scmp.eq.s32.totalorder %s59, 0
    %s62 = sadd.s32 %s61, 1
    %s63 = scalar_select %p60, %s61, %s62
    %p66 = pneg %p60
    %p67 = scmp.eq.s32.totalorder %s9, 1
    %p68 = por %p66, %p67
    %p69 = scmp.ne.s32.totalorder %s61, %s64
    %p70 = scmp.eq.s32.totalorder %s9, 0
    %p71 = por %p69, %p70
    %p72 = scmp.ne.s32.totalorder %s61, %s64
    %p73 = scmp.eq.s32.totalorder %s14, 1
    %p74 = por %p72, %p73
    %p75 = scmp.ne.s32.totalorder %s64, %s65
    %p76 = scmp.eq.s32.totalorder %s14, 0
    %p77 = por %p75, %p76
    %p78 = scmp.ne.s32.totalorder %s64, %s65
    %p79 = scmp.eq.s32.totalorder %s15, 1
    %p80 = por %p78, %p79
    %p82 = scmp.ne.s32.totalorder %s65, %s81
    %p83 = scmp.eq.s32.totalorder %s15, 0
    %p84 = por %p82, %p83
    %s85 = ssub.s32 %s9, %s16
    %p86 = scmp.eq.s32.totalorder %s85, 0
    %s88 = sadd.s32 %s87, 1
    %s89 = scalar_select %p86, %s87, %s88
    %p92 = pneg %p86
    %p93 = scmp.eq.s32.totalorder %s9, 1
    %p94 = por %p92, %p93
    %p95 = scmp.ne.s32.totalorder %s87, %s90
    %p96 = scmp.eq.s32.totalorder %s9, 0
    %p97 = por %p95, %p96
    %p98 = scmp.ne.s32.totalorder %s87, %s90
    %p99 = scmp.eq.s32.totalorder %s14, 1
    %p100 = por %p98, %p99
    %p101 = scmp.ne.s32.totalorder %s90, %s91
    %p102 = scmp.eq.s32.totalorder %s14, 0
    %p103 = por %p101, %p102
    %p104 = scmp.ne.s32.totalorder %s90, %s91
    %p105 = scmp.eq.s32.totalorder %s15, 1
    %p106 = por %p104, %p105
    %p108 = scmp.ne.s32.totalorder %s91, %s107
    %p109 = scmp.eq.s32.totalorder %s15, 0
    %p110 = por %p108, %p109
    %p111 = scmp.le.s32.totalorder 1, %s9
    %p112 = scmp.lt.s32.totalorder %s9, 3
    %p113 = pnand %p111, %p112
    %p114 = pneg %p113
    // Predicated region
    $region9: #{tpu_custom_call.1} parent=5 // pred_check
      _
    $region10: #{tpu_custom_call.1} parent=5 // pred_check_branch
      %116 = sbr.rel (%p113) target = $region12
    $region11: #{tpu_custom_call.1} parent=5 // pred_region
      %s117 = ssub.s32 %s9, 1
      // Predicated region
      $region13: #{tpu_custom_call.1} parent=11 // pred_check
        %p118 = pneg %p30
      $region14: #{tpu_custom_call.1} parent=11 // pred_check_branch
        %120 = sbr.rel (%p118) target = $region16
      $region15: #{tpu_custom_call.1} parent=11 // pred_region
        _
      $region16: #{tpu_custom_call.1} parent=11 // pred_fallthru
        _
      // Predicated region
      $region17: #{tpu_custom_call.1} parent=11 // pred_check
        %p121 = pneg %p51
      $region18: #{tpu_custom_call.1} parent=11 // pred_check_branch
        %123 = sbr.rel (%p121) target = $region20
      $region19: #{tpu_custom_call.1} parent=11 // pred_region
        _
      $region20: #{tpu_custom_call.1} parent=11 // pred_fallthru
        _
    $region12: #{tpu_custom_call.1} parent=5 // pred_fallthru
      _
    %p124 = scmp.lt.s32.totalorder %s9, 2
    // Predicated region
    $region21: #{tpu_custom_call.1} parent=5 // pred_check
      %p125 = pneg %p124
    $region22: #{tpu_custom_call.1} parent=5 // pred_check_branch
      %127 = sbr.rel (%p125) target = $region24
    $region23: #{tpu_custom_call.1} parent=5 // pred_region
      // Predicated region
      $region25: #{tpu_custom_call.1} parent=23 // pred_check
        %p128 = pneg %p71
      $region26: #{tpu_custom_call.1} parent=23 // pred_check_branch
        %130 = sbr.rel (%p128) target = $region28
      $region27: #{tpu_custom_call.1} parent=23 // pred_region
        %s131 = smul.u32 20, %s9
        %p132 = scmp.lt.s32.totalorder %s131, 39
        %s133 = scalar_select %p132, %s131, 39
        %s134 = smul.addr %s133, 9
        %s135 = smul.addr %s134, 4
        %s136 = scalar_lea.vmem %s2, %s135
        %s137 = smul.u32 20, %s9
      $region28: #{tpu_custom_call.1} parent=23 // pred_fallthru
        _
    $region24: #{tpu_custom_call.1} parent=5 // pred_fallthru
      _
    %p138 = scmp.le.s32.totalorder 1, %s9
    %p139 = scmp.lt.s32.totalorder %s9, 3
    %p140 = pnand %p138, %p139
    %p141 = pneg %p140
    // Predicated region
    $region29: #{tpu_custom_call.1} parent=5 // pred_check
      _
    $region30: #{tpu_custom_call.1} parent=5 // pred_check_branch
      %143 = sbr.rel (%p140) target = $region32
    $region31: #{tpu_custom_call.1} parent=5 // pred_region
      %s144 = ssub.s32 %s9, 1
      %p145 = pneg %p30
      %p146 = pneg %p27
      %p147 = pneg %p51
      %p148 = pneg %p48
      %s149 = smul.u32 20, %s14
      %p150 = scmp.lt.s32.totalorder %s149, 39
      %s151 = scalar_select %p150, %s149, 39
      %s152 = smul.addr %s151, 9
      %s153 = smul.addr %s152, 4
      %s154 = scalar_lea.vmem %s2, %s153
      %p155 = pneg %p77
      %p156 = pneg %p74
      %p157 = pneg %p103
      %p158 = pneg %p100
      %s159 = smul.u32 20, %s14
      %p160 = scmp.lt.s32.totalorder %s159, 39
      %s161 = scalar_select %p160, %s159, 39
      %s162 = smul.addr %s161, 8
      %s163 = scalar_lea.vmem %s3, %s162
      %s164 = smul.u32 20, %s14
      %p165 = scmp.lt.s32.totalorder %s164, 39
      %s166 = scalar_select %p165, %s164, 39
      %s167 = smul.addr %s166, 9
      %s168 = smul.addr %s167, 4
      %s169 = scalar_lea.vmem %s2, %s168
      %s170 = smul.u32 20, %s14
      %s171 = smul.u32 20, %s14
      %p172 = scmp.lt.s32.totalorder %s171, 39
      %s173 = scalar_select %p172, %s171, 39
      %s174 = smul.addr %s173, 8
      %s175 = scalar_lea.vmem %s3, %s174
      %s176 = smul.u32 20, %s14
      %v178 = vld [vmem:[%s1] sm:$0xff]
      %v179 = vld [vmem:[%s1 + $0x8] sm:$0xff]
      %v180 = vld [vmem:[%s1 + $0x10] sm:$0xff]
      %v181 = vld [vmem:[%s1 + $0x18] sm:$0xff]
      %v182 = vld [vmem:[%s1 + $0x20] sm:$0xff]
      %v183 = vld [vmem:[%s1 + $0x28] sm:$0xff]
      %v184 = vld [vmem:[%s1 + $0x30] sm:$0xff]
      %v185 = vld [vmem:[%s1 + $0x38] sm:$0xff]
      %v186 = vld [vmem:[%s1 + $0x40] sm:$0xff]
      %v187 = vld [vmem:[%s1 + $0x48] sm:$0xff]
      %v188 = vld [vmem:[%s1 + $0x50] sm:$0xff]
      %v189 = vld [vmem:[%s1 + $0x58] sm:$0xff]
      %v190 = vld [vmem:[%s1 + $0x60] sm:$0xff]
      %v191 = vld [vmem:[%s1 + $0x68] sm:$0xff]
      %v192 = vld [vmem:[%s1 + $0x70] sm:$0xff]
      %v193 = vld [vmem:[%s1 + $0x78] sm:$0xff]
      %v194 = vld [vmem:[%s1 + $0x80] sm:$0xff]
      %v195 = vld [vmem:[%s1 + $0x88] sm:$0xff]
      %v196 = vld [vmem:[%s1 + $0x90] sm:$0xff]
      %v197 = vld [vmem:[%s1 + $0x98] sm:$0xff]
      %v198 = vld [vmem:[%s1 + $0xa0] sm:$0xff]
      %v199 = vld [vmem:[%s1 + $0xa8] sm:$0xff]
      %v200 = vld [vmem:[%s1 + $0xb0] sm:$0xff]
      %v201 = vld [vmem:[%s1 + $0xb8] sm:$0xff]
      %v202 = vld [vmem:[%s1 + $0xc0] sm:$0xff]
      %v203 = vld [vmem:[%s1 + $0xc8] sm:$0xff]
      %v204 = vld [vmem:[%s1 + $0xd0] sm:$0xff]
      %v205 = vld [vmem:[%s1 + $0xd8] sm:$0xff]
      %v206 = vld [vmem:[%s1 + $0xe0] sm:$0xff]
      %v207 = vld [vmem:[%s1 + $0xe8] sm:$0xff]
      %v208 = vld [vmem:[%s1 + $0xf0] sm:$0xff]
      %v209 = vld [vmem:[%s1 + $0xf8] sm:$0xff]
      %v210 = vld [vmem:[%s1 + $0x100] sm:$0xff]
      %v211 = vld [vmem:[%s1 + $0x108] sm:$0xff]
      %v212 = vld [vmem:[%s1 + $0x110] sm:$0xff]
      %v213 = vld [vmem:[%s1 + $0x118] sm:$0xff]
      %v214 = vld [vmem:[%s1 + $0x120] sm:$0xff]
      %v215 = vld [vmem:[%s1 + $0x128] sm:$0xff]
      %v216 = vld [vmem:[%s1 + $0x130] sm:$0xff]
      %v217 = vld [vmem:[%s1 + $0x138] sm:$0xff]
      %v218 = vld [vmem:[%s1 + $0x140] sm:$0xff]
      %v219 = vld [vmem:[%s1 + $0x148] sm:$0xff]
      %v220 = vld [vmem:[%s1 + $0x150] sm:$0xff]
      %v221 = vld [vmem:[%s1 + $0x158] sm:$0xff]
      %v222 = vld [vmem:[%s1 + $0x160] sm:$0xff]
      %v223 = vld [vmem:[%s1 + $0x168] sm:$0xff]
      %v224 = vld [vmem:[%s1 + $0x170] sm:$0xff]
      %v225 = vld [vmem:[%s1 + $0x178] sm:$0xff]
      %v226 = vld [vmem:[%s1 + $0x180] sm:$0xff]
      %v227 = vld [vmem:[%s1 + $0x188] sm:$0xff]
      %v228 = vld [vmem:[%s1 + $0x190] sm:$0xff]
      %v229 = vld [vmem:[%s1 + $0x198] sm:$0xff]
      %v230 = vld [vmem:[%s1 + $0x1a0] sm:$0xff]
      %v231 = vld [vmem:[%s1 + $0x1a8] sm:$0xff]
      %v232 = vld [vmem:[%s1 + $0x1b0] sm:$0xff]
      %v233 = vld [vmem:[%s1 + $0x1b8] sm:$0xff]
      %v234 = vld [vmem:[%s1 + $0x1c0] sm:$0xff]
      %v235 = vld [vmem:[%s1 + $0x1c8] sm:$0xff]
      %v236 = vld [vmem:[%s1 + $0x1d0] sm:$0xff]
      %v237 = vld [vmem:[%s1 + $0x1d8] sm:$0xff]
      %v238 = vld [vmem:[%s1 + $0x1e0] sm:$0xff]
      %v239 = vld [vmem:[%s1 + $0x1e8] sm:$0xff]
      %v240 = vld [vmem:[%s1 + $0x1f0] sm:$0xff]
      %v241 = vld [vmem:[%s1 + $0x1f8] sm:$0xff]
      %v242 = vld [vmem:[%s1 + $0x200] sm:$0xff]
      %v243 = vld [vmem:[%s1 + $0x208] sm:$0xff]
      %v244 = vld [vmem:[%s1 + $0x210] sm:$0xff]
      %v245 = vld [vmem:[%s1 + $0x218] sm:$0xff]
      %v246 = vld [vmem:[%s1 + $0x220] sm:$0xff]
      %v247 = vld [vmem:[%s1 + $0x228] sm:$0xff]
      %v248 = vld [vmem:[%s1 + $0x230] sm:$0xff]
      %v249 = vld [vmem:[%s1 + $0x238] sm:$0xff]
      %v250 = vld [vmem:[%s1 + $0x240] sm:$0xff]
      %v251 = vld [vmem:[%s1 + $0x248] sm:$0xff]
      %v252 = vld [vmem:[%s1 + $0x250] sm:$0xff]
      %v253 = vld [vmem:[%s1 + $0x258] sm:$0xff]
      %v254 = vld [vmem:[%s1 + $0x260] sm:$0xff]
      %v255 = vld [vmem:[%s1 + $0x268] sm:$0xff]
      %v256 = vld [vmem:[%s1 + $0x270] sm:$0xff]
      %v257 = vld [vmem:[%s1 + $0x278] sm:$0xff]
      %v258 = vld [vmem:[%s1 + $0x280] sm:$0xff]
      %v259 = vld [vmem:[%s1 + $0x288] sm:$0xff]
      %v260 = vld [vmem:[%s1 + $0x290] sm:$0xff]
      %v261 = vld [vmem:[%s1 + $0x298] sm:$0xff]
      %v262 = vld [vmem:[%s1 + $0x2a0] sm:$0xff]
      %v263 = vld [vmem:[%s1 + $0x2a8] sm:$0xff]
      %v264 = vld [vmem:[%s1 + $0x2b0] sm:$0xff]
      %v265 = vld [vmem:[%s1 + $0x2b8] sm:$0xff]
      %v266 = vld [vmem:[%s1 + $0x2c0] sm:$0xff]
      %v267 = vld [vmem:[%s1 + $0x2c8] sm:$0xff]
      %v268 = vld [vmem:[%s1 + $0x2d0] sm:$0xff]
      %v269 = vld [vmem:[%s1 + $0x2d8] sm:$0xff]
      %v270 = vld [vmem:[%s1 + $0x2e0] sm:$0xff]
      %v271 = vld [vmem:[%s1 + $0x2e8] sm:$0xff]
      %v272 = vld [vmem:[%s1 + $0x2f0] sm:$0xff]
      %v273 = vld [vmem:[%s1 + $0x2f8] sm:$0xff]
      %v274 = vld [vmem:[%s1 + $0x300] sm:$0xff]
      %v275 = vld [vmem:[%s1 + $0x308] sm:$0xff]
      %v276 = vld [vmem:[%s1 + $0x310] sm:$0xff]
      %v277 = vld [vmem:[%s1 + $0x318] sm:$0xff]
      %v278 = vld [vmem:[%s1 + $0x320] sm:$0xff]
      %v279 = vld [vmem:[%s1 + $0x328] sm:$0xff]
      %v280 = vld [vmem:[%s1 + $0x330] sm:$0xff]
      %v281 = vld [vmem:[%s1 + $0x338] sm:$0xff]
      %v282 = vld [vmem:[%s1 + $0x340] sm:$0xff]
      %v283 = vld [vmem:[%s1 + $0x348] sm:$0xff]
      %v284 = vld [vmem:[%s1 + $0x350] sm:$0xff]
      %v285 = vld [vmem:[%s1 + $0x358] sm:$0xff]
      %v286 = vld [vmem:[%s1 + $0x360] sm:$0xff]
      %v287 = vld [vmem:[%s1 + $0x368] sm:$0xff]
      %v288 = vld [vmem:[%s1 + $0x370] sm:$0xff]
      %v289 = vld [vmem:[%s1 + $0x378] sm:$0xff]
      %v290 = vld [vmem:[%s1 + $0x380] sm:$0xff]
      %v291 = vld [vmem:[%s1 + $0x388] sm:$0xff]
      %v292 = vld [vmem:[%s1 + $0x390] sm:$0xff]
      %v293 = vld [vmem:[%s1 + $0x398] sm:$0xff]
      %v294 = vld [vmem:[%s1 + $0x3a0] sm:$0xff]
      %v295 = vld [vmem:[%s1 + $0x3a8] sm:$0xff]
      %v296 = vld [vmem:[%s1 + $0x3b0] sm:$0xff]
      %v297 = vld [vmem:[%s1 + $0x3b8] sm:$0xff]
      %v298 = vld [vmem:[%s1 + $0x3c0] sm:$0xff]
      %v299 = vld [vmem:[%s1 + $0x3c8] sm:$0xff]
      %v300 = vld [vmem:[%s1 + $0x3d0] sm:$0xff]
      %v301 = vld [vmem:[%s1 + $0x3d8] sm:$0xff]
      %v302 = vld [vmem:[%s1 + $0x3e0] sm:$0xff]
      %v303 = vld [vmem:[%s1 + $0x3e8] sm:$0xff]
      %v304 = vld [vmem:[%s1 + $0x3f0] sm:$0xff]
      %v305 = vld [vmem:[%s1 + $0x3f8] sm:$0xff]
      %v306 = vld [vmem:[%s1 + $0x400] sm:$0xff]
      %v307 = vld [vmem:[%s1 + $0x408] sm:$0xff]
      %v308 = vld [vmem:[%s1 + $0x410] sm:$0xff]
      %v309 = vld [vmem:[%s1 + $0x418] sm:$0xff]
      %v310 = vld [vmem:[%s1 + $0x420] sm:$0xff]
      %v311 = vld [vmem:[%s1 + $0x428] sm:$0xff]
      %v312 = vld [vmem:[%s1 + $0x430] sm:$0xff]
      %v313 = vld [vmem:[%s1 + $0x438] sm:$0xff]
      %v314 = vld [vmem:[%s1 + $0x440] sm:$0xff]
      %v315 = vld [vmem:[%s1 + $0x448] sm:$0xff]
      %v316 = vld [vmem:[%s1 + $0x450] sm:$0xff]
      %v317 = vld [vmem:[%s1 + $0x458] sm:$0xff]
      %v318 = vld [vmem:[%s1 + $0x460] sm:$0xff]
      %v319 = vld [vmem:[%s1 + $0x468] sm:$0xff]
      %v320 = vld [vmem:[%s1 + $0x470] sm:$0xff]
      %v321 = vld [vmem:[%s1 + $0x478] sm:$0xff]
      %v322 = vxor.u32 %v178, 2147483648
      %v323 = vxor.u32 %v179, 2147483648
      %v324 = vxor.u32 %v180, 2147483648
      %v325 = vxor.u32 %v181, 2147483648
      %v326 = vxor.u32 %v182, 2147483648
      %v327 = vxor.u32 %v183, 2147483648
      %v328 = vxor.u32 %v184, 2147483648
      %v329 = vxor.u32 %v185, 2147483648
      %v330 = vxor.u32 %v186, 2147483648
      %v331 = vxor.u32 %v187, 2147483648
      %v332 = vxor.u32 %v188, 2147483648
      %v333 = vxor.u32 %v189, 2147483648
      %v334 = vxor.u32 %v190, 2147483648
      %v335 = vxor.u32 %v191, 2147483648
      %v336 = vxor.u32 %v192, 2147483648
      %v337 = vxor.u32 %v193, 2147483648
      %v338 = vxor.u32 %v194, 2147483648
      %v339 = vxor.u32 %v195, 2147483648
      %v340 = vxor.u32 %v196, 2147483648
      %v341 = vxor.u32 %v197, 2147483648
      %v342 = vxor.u32 %v198, 2147483648
      %v343 = vxor.u32 %v199, 2147483648
      %v344 = vxor.u32 %v200, 2147483648
      %v345 = vxor.u32 %v201, 2147483648
      %v346 = vxor.u32 %v202, 2147483648
      %v347 = vxor.u32 %v203, 2147483648
      %v348 = vxor.u32 %v204, 2147483648
      %v349 = vxor.u32 %v205, 2147483648
      %v350 = vxor.u32 %v206, 2147483648
      %v351 = vxor.u32 %v207, 2147483648
      %v352 = vxor.u32 %v208, 2147483648
      %v353 = vxor.u32 %v209, 2147483648
      %v354 = vxor.u32 %v210, 2147483648
      %v355 = vxor.u32 %v211, 2147483648
      %v356 = vxor.u32 %v212, 2147483648
      %v357 = vxor.u32 %v213, 2147483648
      %v358 = vxor.u32 %v214, 2147483648
      %v359 = vxor.u32 %v215, 2147483648
      %v360 = vxor.u32 %v216, 2147483648
      %v361 = vxor.u32 %v217, 2147483648
      %v362 = vxor.u32 %v218, 2147483648
      %v363 = vxor.u32 %v219, 2147483648
      %v364 = vxor.u32 %v220, 2147483648
      %v365 = vxor.u32 %v221, 2147483648
      %v366 = vxor.u32 %v222, 2147483648
      %v367 = vxor.u32 %v223, 2147483648
      %v368 = vxor.u32 %v224, 2147483648
      %v369 = vxor.u32 %v225, 2147483648
      %v370 = vxor.u32 %v226, 2147483648
      %v371 = vxor.u32 %v227, 2147483648
      %v372 = vxor.u32 %v228, 2147483648
      %v373 = vxor.u32 %v229, 2147483648
      %v374 = vxor.u32 %v230, 2147483648
      %v375 = vxor.u32 %v231, 2147483648
      %v376 = vxor.u32 %v232, 2147483648
      %v377 = vxor.u32 %v233, 2147483648
      %v378 = vxor.u32 %v234, 2147483648
      %v379 = vxor.u32 %v235, 2147483648
      %v380 = vxor.u32 %v236, 2147483648
      %v381 = vxor.u32 %v237, 2147483648
      %v382 = vxor.u32 %v238, 2147483648
      %v383 = vxor.u32 %v239, 2147483648
      %v384 = vxor.u32 %v240, 2147483648
      %v385 = vxor.u32 %v241, 2147483648
      %v386 = vxor.u32 %v242, 2147483648
      %v387 = vxor.u32 %v243, 2147483648
      %v388 = vxor.u32 %v244, 2147483648
      %v389 = vxor.u32 %v245, 2147483648
      %v390 = vxor.u32 %v246, 2147483648
      %v391 = vxor.u32 %v247, 2147483648
      %v392 = vxor.u32 %v248, 2147483648
      %v393 = vxor.u32 %v249, 2147483648
      %v394 = vxor.u32 %v250, 2147483648
      %v395 = vxor.u32 %v251, 2147483648
      %v396 = vxor.u32 %v252, 2147483648
      %v397 = vxor.u32 %v253, 2147483648
      %v398 = vxor.u32 %v254, 2147483648
      %v399 = vxor.u32 %v255, 2147483648
      %v400 = vxor.u32 %v256, 2147483648
      %v401 = vxor.u32 %v257, 2147483648
      %v402 = vxor.u32 %v258, 2147483648
      %v403 = vxor.u32 %v259, 2147483648
      %v404 = vxor.u32 %v260, 2147483648
      %v405 = vxor.u32 %v261, 2147483648
      %v406 = vxor.u32 %v262, 2147483648
      %v407 = vxor.u32 %v263, 2147483648
      %v408 = vxor.u32 %v264, 2147483648
      %v409 = vxor.u32 %v265, 2147483648
      %v410 = vxor.u32 %v266, 2147483648
      %v411 = vxor.u32 %v267, 2147483648
      %v412 = vxor.u32 %v268, 2147483648
      %v413 = vxor.u32 %v269, 2147483648
      %v414 = vxor.u32 %v270, 2147483648
      %v415 = vxor.u32 %v271, 2147483648
      %v416 = vxor.u32 %v272, 2147483648
      %v417 = vxor.u32 %v273, 2147483648
      %v418 = vxor.u32 %v274, 2147483648
      %v419 = vxor.u32 %v275, 2147483648
      %v420 = vxor.u32 %v276, 2147483648
      %v421 = vxor.u32 %v277, 2147483648
      %v422 = vxor.u32 %v278, 2147483648
      %v423 = vxor.u32 %v279, 2147483648
      %v424 = vxor.u32 %v280, 2147483648
      %v425 = vxor.u32 %v281, 2147483648
      %v426 = vxor.u32 %v282, 2147483648
      %v427 = vxor.u32 %v283, 2147483648
      %v428 = vxor.u32 %v284, 2147483648
      %v429 = vxor.u32 %v285, 2147483648
      %v430 = vxor.u32 %v286, 2147483648
      %v431 = vxor.u32 %v287, 2147483648
      %v432 = vxor.u32 %v288, 2147483648
      %v433 = vxor.u32 %v289, 2147483648
      %v434 = vxor.u32 %v290, 2147483648
      %v435 = vxor.u32 %v291, 2147483648
      %v436 = vxor.u32 %v292, 2147483648
      %v437 = vxor.u32 %v293, 2147483648
      %v438 = vxor.u32 %v294, 2147483648
      %v439 = vxor.u32 %v295, 2147483648
      %v440 = vxor.u32 %v296, 2147483648
      %v441 = vxor.u32 %v297, 2147483648
      %v442 = vxor.u32 %v298, 2147483648
      %v443 = vxor.u32 %v299, 2147483648
      %v444 = vxor.u32 %v300, 2147483648
      %v445 = vxor.u32 %v301, 2147483648
      %v446 = vxor.u32 %v302, 2147483648
      %v447 = vxor.u32 %v303, 2147483648
      %v448 = vxor.u32 %v304, 2147483648
      %v449 = vxor.u32 %v305, 2147483648
      %v450 = vxor.u32 %v306, 2147483648
      %v451 = vxor.u32 %v307, 2147483648
      %v452 = vxor.u32 %v308, 2147483648
      %v453 = vxor.u32 %v309, 2147483648
      %v454 = vxor.u32 %v310, 2147483648
      %v455 = vxor.u32 %v311, 2147483648
      %v456 = vxor.u32 %v312, 2147483648
      %v457 = vxor.u32 %v313, 2147483648
      %v458 = vxor.u32 %v314, 2147483648
      %v459 = vxor.u32 %v315, 2147483648
      %v460 = vxor.u32 %v316, 2147483648
      %v461 = vxor.u32 %v317, 2147483648
      %v462 = vxor.u32 %v318, 2147483648
      %v463 = vxor.u32 %v319, 2147483648
      %v464 = vxor.u32 %v320, 2147483648
      %v465 = vxor.u32 %v321, 2147483648
      %v466 = vmul.f32 %v322, 1.442695
      %v467 = vpow.pop %v466
      %v468 = vmul.f32 %v323, 1.442695
      %v469 = vpow.pop %v468
      %v470 = vmul.f32 %v324, 1.442695
      %v471 = vpow.pop %v470
      %v472 = vmul.f32 %v325, 1.442695
      %v473 = vpow.pop %v472
      %v474 = vmul.f32 %v326, 1.442695
      %v475 = vpow.pop %v474
      %v476 = vmul.f32 %v327, 1.442695
      %v477 = vpow.pop %v476
      %v478 = vmul.f32 %v328, 1.442695
      %v479 = vpow.pop %v478
      %v480 = vmul.f32 %v329, 1.442695
      %v481 = vpow.pop %v480
      %v482 = vmul.f32 %v330, 1.442695
      %v483 = vpow.pop %v482
      %v484 = vmul.f32 %v331, 1.442695
      %v485 = vpow.pop %v484
      %v486 = vmul.f32 %v332, 1.442695
      %v487 = vpow.pop %v486
      %v488 = vmul.f32 %v333, 1.442695
      %v489 = vpow.pop %v488
      %v490 = vmul.f32 %v334, 1.442695
      %v491 = vpow.pop %v490
      %v492 = vmul.f32 %v335, 1.442695
      %v493 = vpow.pop %v492
      %v494 = vmul.f32 %v336, 1.442695
      %v495 = vpow.pop %v494
      %v496 = vmul.f32 %v337, 1.442695
      %v497 = vpow.pop %v496
      %v498 = vmul.f32 %v338, 1.442695
      %v499 = vpow.pop %v498
      %v500 = vmul.f32 %v339, 1.442695
      %v501 = vpow.pop %v500
      %v502 = vmul.f32 %v340, 1.442695
      %v503 = vpow.pop %v502
      %v504 = vmul.f32 %v341, 1.442695
      %v505 = vpow.pop %v504
      %v506 = vmul.f32 %v342, 1.442695
      %v507 = vpow.pop %v506
      %v508 = vmul.f32 %v343, 1.442695
      %v509 = vpow.pop %v508
      %v510 = vmul.f32 %v344, 1.442695
      %v511 = vpow.pop %v510
      %v512 = vmul.f32 %v345, 1.442695
      %v513 = vpow.pop %v512
      %v514 = vmul.f32 %v346, 1.442695
      %v515 = vpow.pop %v514
      %v516 = vmul.f32 %v347, 1.442695
      %v517 = vpow.pop %v516
      %v518 = vmul.f32 %v348, 1.442695
      %v519 = vpow.pop %v518
      %v520 = vmul.f32 %v349, 1.442695
      %v521 = vpow.pop %v520
      %v522 = vmul.f32 %v350, 1.442695
      %v523 = vpow.pop %v522
      %v524 = vmul.f32 %v351, 1.442695
      %v525 = vpow.pop %v524
      %v526 = vmul.f32 %v352, 1.442695
      %v527 = vpow.pop %v526
      %v528 = vmul.f32 %v353, 1.442695
      %v529 = vpow.pop %v528
      %v530 = vmul.f32 %v354, 1.442695
      %v531 = vpow.pop %v530
      %v532 = vmul.f32 %v355, 1.442695
      %v533 = vpow.pop %v532
      %v534 = vmul.f32 %v356, 1.442695
      %v535 = vpow.pop %v534
      %v536 = vmul.f32 %v357, 1.442695
      %v537 = vpow.pop %v536
      %v538 = vmul.f32 %v358, 1.442695
      %v539 = vpow.pop %v538
      %v540 = vmul.f32 %v359, 1.442695
      %v541 = vpow.pop %v540
      %v542 = vmul.f32 %v360, 1.442695
      %v543 = vpow.pop %v542
      %v544 = vmul.f32 %v361, 1.442695
      %v545 = vpow.pop %v544
      %v546 = vmul.f32 %v362, 1.442695
      %v547 = vpow.pop %v546
      %v548 = vmul.f32 %v363, 1.442695
      %v549 = vpow.pop %v548
      %v550 = vmul.f32 %v364, 1.442695
      %v551 = vpow.pop %v550
      %v552 = vmul.f32 %v365, 1.442695
      %v553 = vpow.pop %v552
      %v554 = vmul.f32 %v366, 1.442695
      %v555 = vpow.pop %v554
      %v556 = vmul.f32 %v367, 1.442695
      %v557 = vpow.pop %v556
      %v558 = vmul.f32 %v368, 1.442695
      %v559 = vpow.pop %v558
      %v560 = vmul.f32 %v369, 1.442695
      %v561 = vpow.pop %v560
      %v562 = vmul.f32 %v370, 1.442695
      %v563 = vpow.pop %v562
      %v564 = vmul.f32 %v371, 1.442695
      %v565 = vpow.pop %v564
      %v566 = vmul.f32 %v372, 1.442695
      %v567 = vpow.pop %v566
      %v568 = vmul.f32 %v373, 1.442695
      %v569 = vpow.pop %v568
      %v570 = vmul.f32 %v374, 1.442695
      %v571 = vpow.pop %v570
      %v572 = vmul.f32 %v375, 1.442695
      %v573 = vpow.pop %v572
      %v574 = vmul.f32 %v376, 1.442695
      %v575 = vpow.pop %v574
      %v576 = vmul.f32 %v377, 1.442695
      %v577 = vpow.pop %v576
      %v578 = vmul.f32 %v378, 1.442695
      %v579 = vpow.pop %v578
      %v580 = vmul.f32 %v379, 1.442695
      %v581 = vpow.pop %v580
      %v582 = vmul.f32 %v380, 1.442695
      %v583 = vpow.pop %v582
      %v584 = vmul.f32 %v381, 1.442695
      %v585 = vpow.pop %v584
      %v586 = vmul.f32 %v382, 1.442695
      %v587 = vpow.pop %v586
      %v588 = vmul.f32 %v383, 1.442695
      %v589 = vpow.pop %v588
      %v590 = vmul.f32 %v384, 1.442695
      %v591 = vpow.pop %v590
      %v592 = vmul.f32 %v385, 1.442695
      %v593 = vpow.pop %v592
      %v594 = vmul.f32 %v386, 1.442695
      %v595 = vpow.pop %v594
      %v596 = vmul.f32 %v387, 1.442695
      %v597 = vpow.pop %v596
      %v598 = vmul.f32 %v388, 1.442695
      %v599 = vpow.pop %v598
      %v600 = vmul.f32 %v389, 1.442695
      %v601 = vpow.pop %v600
      %v602 = vmul.f32 %v390, 1.442695
      %v603 = vpow.pop %v602
      %v604 = vmul.f32 %v391, 1.442695
      %v605 = vpow.pop %v604
      %v606 = vmul.f32 %v392, 1.442695
      %v607 = vpow.pop %v606
      %v608 = vmul.f32 %v393, 1.442695
      %v609 = vpow.pop %v608
      %v610 = vmul.f32 %v394, 1.442695
      %v611 = vpow.pop %v610
      %v612 = vmul.f32 %v395, 1.442695
      %v613 = vpow.pop %v612
      %v614 = vmul.f32 %v396, 1.442695
      %v615 = vpow.pop %v614
      %v616 = vmul.f32 %v397, 1.442695
      %v617 = vpow.pop %v616
      %v618 = vmul.f32 %v398, 1.442695
      %v619 = vpow.pop %v618
      %v620 = vmul.f32 %v399, 1.442695
      %v621 = vpow.pop %v620
      %v622 = vmul.f32 %v400, 1.442695
      %v623 = vpow.pop %v622
      %v624 = vmul.f32 %v401, 1.442695
      %v625 = vpow.pop %v624
      %v626 = vmul.f32 %v402, 1.442695
      %v627 = vpow.pop %v626
      %v628 = vmul.f32 %v403, 1.442695
      %v629 = vpow.pop %v628
      %v630 = vmul.f32 %v404, 1.442695
      %v631 = vpow.pop %v630
      %v632 = vmul.f32 %v405, 1.442695
      %v633 = vpow.pop %v632
      %v634 = vmul.f32 %v406, 1.442695
      %v635 = vpow.pop %v634
      %v636 = vmul.f32 %v407, 1.442695
      %v637 = vpow.pop %v636
      %v638 = vmul.f32 %v408, 1.442695
      %v639 = vpow.pop %v638
      %v640 = vmul.f32 %v409, 1.442695
      %v641 = vpow.pop %v640
      %v642 = vmul.f32 %v410, 1.442695
      %v643 = vpow.pop %v642
      %v644 = vmul.f32 %v411, 1.442695
      %v645 = vpow.pop %v644
      %v646 = vmul.f32 %v412, 1.442695
      %v647 = vpow.pop %v646
      %v648 = vmul.f32 %v413, 1.442695
      %v649 = vpow.pop %v648
      %v650 = vmul.f32 %v414, 1.442695
      %v651 = vpow.pop %v650
      %v652 = vmul.f32 %v415, 1.442695
      %v653 = vpow.pop %v652
      %v654 = vmul.f32 %v416, 1.442695
      %v655 = vpow.pop %v654
      %v656 = vmul.f32 %v417, 1.442695
      %v657 = vpow.pop %v656
      %v658 = vmul.f32 %v418, 1.442695
      %v659 = vpow.pop %v658
      %v660 = vmul.f32 %v419, 1.442695
      %v661 = vpow.pop %v660
      %v662 = vmul.f32 %v420, 1.442695
      %v663 = vpow.pop %v662
      %v664 = vmul.f32 %v421, 1.442695
      %v665 = vpow.pop %v664
      %v666 = vmul.f32 %v422, 1.442695
      %v667 = vpow.pop %v666
      %v668 = vmul.f32 %v423, 1.442695
      %v669 = vpow.pop %v668
      %v670 = vmul.f32 %v424, 1.442695
      %v671 = vpow.pop %v670
      %v672 = vmul.f32 %v425, 1.442695
      %v673 = vpow.pop %v672
      %v674 = vmul.f32 %v426, 1.442695
      %v675 = vpow.pop %v674
      %v676 = vmul.f32 %v427, 1.442695
      %v677 = vpow.pop %v676
      %v678 = vmul.f32 %v428, 1.442695
      %v679 = vpow.pop %v678
      %v680 = vmul.f32 %v429, 1.442695
      %v681 = vpow.pop %v680
      %v682 = vmul.f32 %v430, 1.442695
      %v683 = vpow.pop %v682
      %v684 = vmul.f32 %v431, 1.442695
      %v685 = vpow.pop %v684
      %v686 = vmul.f32 %v432, 1.442695
      %v687 = vpow.pop %v686
      %v688 = vmul.f32 %v433, 1.442695
      %v689 = vpow.pop %v688
      %v690 = vmul.f32 %v434, 1.442695
      %v691 = vpow.pop %v690
      %v692 = vmul.f32 %v435, 1.442695
      %v693 = vpow.pop %v692
      %v694 = vmul.f32 %v436, 1.442695
      %v695 = vpow.pop %v694
      %v696 = vmul.f32 %v437, 1.442695
      %v697 = vpow.pop %v696
      %v698 = vmul.f32 %v438, 1.442695
      %v699 = vpow.pop %v698
      %v700 = vmul.f32 %v439, 1.442695
      %v701 = vpow.pop %v700
      %v702 = vmul.f32 %v440, 1.442695
      %v703 = vpow.pop %v702
      %v704 = vmul.f32 %v441, 1.442695
      %v705 = vpow.pop %v704
      %v706 = vmul.f32 %v442, 1.442695
      %v707 = vpow.pop %v706
      %v708 = vmul.f32 %v443, 1.442695
      %v709 = vpow.pop %v708
      %v710 = vmul.f32 %v444, 1.442695
      %v711 = vpow.pop %v710
      %v712 = vmul.f32 %v445, 1.442695
      %v713 = vpow.pop %v712
      %v714 = vmul.f32 %v446, 1.442695
      %v715 = vpow.pop %v714
      %v716 = vmul.f32 %v447, 1.442695
      %v717 = vpow.pop %v716
      %v718 = vmul.f32 %v448, 1.442695
      %v719 = vpow.pop %v718
      %v720 = vmul.f32 %v449, 1.442695
      %v721 = vpow.pop %v720
      %v722 = vmul.f32 %v450, 1.442695
      %v723 = vpow.pop %v722
      %v724 = vmul.f32 %v451, 1.442695
      %v725 = vpow.pop %v724
      %v726 = vmul.f32 %v452, 1.442695
      %v727 = vpow.pop %v726
      %v728 = vmul.f32 %v453, 1.442695
      %v729 = vpow.pop %v728
      %v730 = vmul.f32 %v454, 1.442695
      %v731 = vpow.pop %v730
      %v732 = vmul.f32 %v455, 1.442695
      %v733 = vpow.pop %v732
      %v734 = vmul.f32 %v456, 1.442695
      %v735 = vpow.pop %v734
      %v736 = vmul.f32 %v457, 1.442695
      %v737 = vpow.pop %v736
      %v738 = vmul.f32 %v458, 1.442695
      %v739 = vpow.pop %v738
      %v740 = vmul.f32 %v459, 1.442695
      %v741 = vpow.pop %v740
      %v742 = vmul.f32 %v460, 1.442695
      %v743 = vpow.pop %v742
      %v744 = vmul.f32 %v461, 1.442695
      %v745 = vpow.pop %v744
      %v746 = vmul.f32 %v462, 1.442695
      %v747 = vpow.pop %v746
      %v748 = vmul.f32 %v463, 1.442695
      %v749 = vpow.pop %v748
      %v750 = vmul.f32 %v464, 1.442695
      %v751 = vpow.pop %v750
      %v752 = vmul.f32 %v465, 1.442695
      %v753 = vpow.pop %v752
      %v754 = vadd.f32 %v467, 1.0
      %v755 = vadd.f32 %v469, 1.0
      %v756 = vadd.f32 %v471, 1.0
      %v757 = vadd.f32 %v473, 1.0
      %v758 = vadd.f32 %v475, 1.0
      %v759 = vadd.f32 %v477, 1.0
      %v760 = vadd.f32 %v479, 1.0
      %v761 = vadd.f32 %v481, 1.0
      %v762 = vadd.f32 %v483, 1.0
      %v763 = vadd.f32 %v485, 1.0
      %v764 = vadd.f32 %v487, 1.0
      %v765 = vadd.f32 %v489, 1.0
      %v766 = vadd.f32 %v491, 1.0
      %v767 = vadd.f32 %v493, 1.0
      %v768 = vadd.f32 %v495, 1.0
      %v769 = vadd.f32 %v497, 1.0
      %v770 = vadd.f32 %v499, 1.0
      %v771 = vadd.f32 %v501, 1.0
      %v772 = vadd.f32 %v503, 1.0
      %v773 = vadd.f32 %v505, 1.0
      %v774 = vadd.f32 %v507, 1.0
      %v775 = vadd.f32 %v509, 1.0
      %v776 = vadd.f32 %v511, 1.0
      %v777 = vadd.f32 %v513, 1.0
      %v778 = vadd.f32 %v515, 1.0
      %v779 = vadd.f32 %v517, 1.0
      %v780 = vadd.f32 %v519, 1.0
      %v781 = vadd.f32 %v521, 1.0
      %v782 = vadd.f32 %v523, 1.0
      %v783 = vadd.f32 %v525, 1.0
      %v784 = vadd.f32 %v527, 1.0
      %v785 = vadd.f32 %v529, 1.0
      %v786 = vadd.f32 %v531, 1.0
      %v787 = vadd.f32 %v533, 1.0
      %v788 = vadd.f32 %v535, 1.0
      %v789 = vadd.f32 %v537, 1.0
      %v790 = vadd.f32 %v539, 1.0
      %v791 = vadd.f32 %v541, 1.0
      %v792 = vadd.f32 %v543, 1.0
      %v793 = vadd.f32 %v545, 1.0
      %v794 = vadd.f32 %v547, 1.0
      %v795 = vadd.f32 %v549, 1.0
      %v796 = vadd.f32 %v551, 1.0
      %v797 = vadd.f32 %v553, 1.0
      %v798 = vadd.f32 %v555, 1.0
      %v799 = vadd.f32 %v557, 1.0
      %v800 = vadd.f32 %v559, 1.0
      %v801 = vadd.f32 %v561, 1.0
      %v802 = vadd.f32 %v563, 1.0
      %v803 = vadd.f32 %v565, 1.0
      %v804 = vadd.f32 %v567, 1.0
      %v805 = vadd.f32 %v569, 1.0
      %v806 = vadd.f32 %v571, 1.0
      %v807 = vadd.f32 %v573, 1.0
      %v808 = vadd.f32 %v575, 1.0
      %v809 = vadd.f32 %v577, 1.0
      %v810 = vadd.f32 %v579, 1.0
      %v811 = vadd.f32 %v581, 1.0
      %v812 = vadd.f32 %v583, 1.0
      %v813 = vadd.f32 %v585, 1.0
      %v814 = vadd.f32 %v587, 1.0
      %v815 = vadd.f32 %v589, 1.0
      %v816 = vadd.f32 %v591, 1.0
      %v817 = vadd.f32 %v593, 1.0
      %v818 = vadd.f32 %v595, 1.0
      %v819 = vadd.f32 %v597, 1.0
      %v820 = vadd.f32 %v599, 1.0
      %v821 = vadd.f32 %v601, 1.0
      %v822 = vadd.f32 %v603, 1.0
      %v823 = vadd.f32 %v605, 1.0
      %v824 = vadd.f32 %v607, 1.0
      %v825 = vadd.f32 %v609, 1.0
      %v826 = vadd.f32 %v611, 1.0
      %v827 = vadd.f32 %v613, 1.0
      %v828 = vadd.f32 %v615, 1.0
      %v829 = vadd.f32 %v617, 1.0
      %v830 = vadd.f32 %v619, 1.0
      %v831 = vadd.f32 %v621, 1.0
      %v832 = vadd.f32 %v623, 1.0
      %v833 = vadd.f32 %v625, 1.0
      %v834 = vadd.f32 %v627, 1.0
      %v835 = vadd.f32 %v629, 1.0
      %v836 = vadd.f32 %v631, 1.0
      %v837 = vadd.f32 %v633, 1.0
      %v838 = vadd.f32 %v635, 1.0
      %v839 = vadd.f32 %v637, 1.0
      %v840 = vadd.f32 %v639, 1.0
      %v841 = vadd.f32 %v641, 1.0
      %v842 = vadd.f32 %v643, 1.0
      %v843 = vadd.f32 %v645, 1.0
      %v844 = vadd.f32 %v647, 1.0
      %v845 = vadd.f32 %v649, 1.0
      %v846 = vadd.f32 %v651, 1.0
      %v847 = vadd.f32 %v653, 1.0
      %v848 = vadd.f32 %v655, 1.0
      %v849 = vadd.f32 %v657, 1.0
      %v850 = vadd.f32 %v659, 1.0
      %v851 = vadd.f32 %v661, 1.0
      %v852 = vadd.f32 %v663, 1.0
      %v853 = vadd.f32 %v665, 1.0
      %v854 = vadd.f32 %v667, 1.0
      %v855 = vadd.f32 %v669, 1.0
      %v856 = vadd.f32 %v671, 1.0
      %v857 = vadd.f32 %v673, 1.0
      %v858 = vadd.f32 %v675, 1.0
      %v859 = vadd.f32 %v677, 1.0
      %v860 = vadd.f32 %v679, 1.0
      %v861 = vadd.f32 %v681, 1.0
      %v862 = vadd.f32 %v683, 1.0
      %v863 = vadd.f32 %v685, 1.0
      %v864 = vadd.f32 %v687, 1.0
      %v865 = vadd.f32 %v689, 1.0
      %v866 = vadd.f32 %v691, 1.0
      %v867 = vadd.f32 %v693, 1.0
      %v868 = vadd.f32 %v695, 1.0
      %v869 = vadd.f32 %v697, 1.0
      %v870 = vadd.f32 %v699, 1.0
      %v871 = vadd.f32 %v701, 1.0
      %v872 = vadd.f32 %v703, 1.0
      %v873 = vadd.f32 %v705, 1.0
      %v874 = vadd.f32 %v707, 1.0
      %v875 = vadd.f32 %v709, 1.0
      %v876 = vadd.f32 %v711, 1.0
      %v877 = vadd.f32 %v713, 1.0
      %v878 = vadd.f32 %v715, 1.0
      %v879 = vadd.f32 %v717, 1.0
      %v880 = vadd.f32 %v719, 1.0
      %v881 = vadd.f32 %v721, 1.0
      %v882 = vadd.f32 %v723, 1.0
      %v883 = vadd.f32 %v725, 1.0
      %v884 = vadd.f32 %v727, 1.0
      %v885 = vadd.f32 %v729, 1.0
      %v886 = vadd.f32 %v731, 1.0
      %v887 = vadd.f32 %v733, 1.0
      %v888 = vadd.f32 %v735, 1.0
      %v889 = vadd.f32 %v737, 1.0
      %v890 = vadd.f32 %v739, 1.0
      %v891 = vadd.f32 %v741, 1.0
      %v892 = vadd.f32 %v743, 1.0
      %v893 = vadd.f32 %v745, 1.0
      %v894 = vadd.f32 %v747, 1.0
      %v895 = vadd.f32 %v749, 1.0
      %v896 = vadd.f32 %v751, 1.0
      %v897 = vadd.f32 %v753, 1.0
      %v898 = vrcp.pop %v754
      %v899 = vmul.f32 1.0, %v898
      %v900 = vrcp.pop %v755
      %v901 = vmul.f32 1.0, %v900
      %v902 = vrcp.pop %v756
      %v903 = vmul.f32 1.0, %v902
      %v904 = vrcp.pop %v757
      %v905 = vmul.f32 1.0, %v904
      %v906 = vrcp.pop %v758
      %v907 = vmul.f32 1.0, %v906
      %v908 = vrcp.pop %v759
      %v909 = vmul.f32 1.0, %v908
      %v910 = vrcp.pop %v760
      %v911 = vmul.f32 1.0, %v910
      %v912 = vrcp.pop %v761
      %v913 = vmul.f32 1.0, %v912
      %v914 = vrcp.pop %v762
      %v915 = vmul.f32 1.0, %v914
      %v916 = vrcp.pop %v763
      %v917 = vmul.f32 1.0, %v916
      %v918 = vrcp.pop %v764
      %v919 = vmul.f32 1.0, %v918
      %v920 = vrcp.pop %v765
      %v921 = vmul.f32 1.0, %v920
      %v922 = vrcp.pop %v766
      %v923 = vmul.f32 1.0, %v922
      %v924 = vrcp.pop %v767
      %v925 = vmul.f32 1.0, %v924
      %v926 = vrcp.pop %v768
      %v927 = vmul.f32 1.0, %v926
      %v928 = vrcp.pop %v769
      %v929 = vmul.f32 1.0, %v928
      %v930 = vrcp.pop %v770
      %v931 = vmul.f32 1.0, %v930
      %v932 = vrcp.pop %v771
      %v933 = vmul.f32 1.0, %v932
      %v934 = vrcp.pop %v772
      %v935 = vmul.f32 1.0, %v934
      %v936 = vrcp.pop %v773
      %v937 = vmul.f32 1.0, %v936
      %v938 = vrcp.pop %v774
      %v939 = vmul.f32 1.0, %v938
      %v940 = vrcp.pop %v775
      %v941 = vmul.f32 1.0, %v940
      %v942 = vrcp.pop %v776
      %v943 = vmul.f32 1.0, %v942
      %v944 = vrcp.pop %v777
      %v945 = vmul.f32 1.0, %v944
      %v946 = vrcp.pop %v778
      %v947 = vmul.f32 1.0, %v946
      %v948 = vrcp.pop %v779
      %v949 = vmul.f32 1.0, %v948
      %v950 = vrcp.pop %v780
      %v951 = vmul.f32 1.0, %v950
      %v952 = vrcp.pop %v781
      %v953 = vmul.f32 1.0, %v952
      %v954 = vrcp.pop %v782
      %v955 = vmul.f32 1.0, %v954
      %v956 = vrcp.pop %v783
      %v957 = vmul.f32 1.0, %v956
      %v958 = vrcp.pop %v784
      %v959 = vmul.f32 1.0, %v958
      %v960 = vrcp.pop %v785
      %v961 = vmul.f32 1.0, %v960
      %v962 = vrcp.pop %v786
      %v963 = vmul.f32 1.0, %v962
      %v964 = vrcp.pop %v787
      %v965 = vmul.f32 1.0, %v964
      %v966 = vrcp.pop %v788
      %v967 = vmul.f32 1.0, %v966
      %v968 = vrcp.pop %v789
      %v969 = vmul.f32 1.0, %v968
      %v970 = vrcp.pop %v790
      %v971 = vmul.f32 1.0, %v970
      %v972 = vrcp.pop %v791
      %v973 = vmul.f32 1.0, %v972
      %v974 = vrcp.pop %v792
      %v975 = vmul.f32 1.0, %v974
      %v976 = vrcp.pop %v793
      %v977 = vmul.f32 1.0, %v976
      %v978 = vrcp.pop %v794
      %v979 = vmul.f32 1.0, %v978
      %v980 = vrcp.pop %v795
      %v981 = vmul.f32 1.0, %v980
      %v982 = vrcp.pop %v796
      %v983 = vmul.f32 1.0, %v982
      %v984 = vrcp.pop %v797
      %v985 = vmul.f32 1.0, %v984
      %v986 = vrcp.pop %v798
      %v987 = vmul.f32 1.0, %v986
      %v988 = vrcp.pop %v799
      %v989 = vmul.f32 1.0, %v988
      %v990 = vrcp.pop %v800
      %v991 = vmul.f32 1.0, %v990
      %v992 = vrcp.pop %v801
      %v993 = vmul.f32 1.0, %v992
      %v994 = vrcp.pop %v802
      %v995 = vmul.f32 1.0, %v994
      %v996 = vrcp.pop %v803
      %v997 = vmul.f32 1.0, %v996
      %v998 = vrcp.pop %v804
      %v999 = vmul.f32 1.0, %v998
      %v1000 = vrcp.pop %v805
      %v1001 = vmul.f32 1.0, %v1000
      %v1002 = vrcp.pop %v806
      %v1003 = vmul.f32 1.0, %v1002
      %v1004 = vrcp.pop %v807
      %v1005 = vmul.f32 1.0, %v1004
      %v1006 = vrcp.pop %v808
      %v1007 = vmul.f32 1.0, %v1006
      %v1008 = vrcp.pop %v809
      %v1009 = vmul.f32 1.0, %v1008
      %v1010 = vrcp.pop %v810
      %v1011 = vmul.f32 1.0, %v1010
      %v1012 = vrcp.pop %v811
      %v1013 = vmul.f32 1.0, %v1012
      %v1014 = vrcp.pop %v812
      %v1015 = vmul.f32 1.0, %v1014
      %v1016 = vrcp.pop %v813
      %v1017 = vmul.f32 1.0, %v1016
      %v1018 = vrcp.pop %v814
      %v1019 = vmul.f32 1.0, %v1018
      %v1020 = vrcp.pop %v815
      %v1021 = vmul.f32 1.0, %v1020
      %v1022 = vrcp.pop %v816
      %v1023 = vmul.f32 1.0, %v1022
      %v1024 = vrcp.pop %v817
      %v1025 = vmul.f32 1.0, %v1024
      %v1026 = vrcp.pop %v818
      %v1027 = vmul.f32 1.0, %v1026
      %v1028 = vrcp.pop %v819
      %v1029 = vmul.f32 1.0, %v1028
      %v1030 = vrcp.pop %v820
      %v1031 = vmul.f32 1.0, %v1030
      %v1032 = vrcp.pop %v821
      %v1033 = vmul.f32 1.0, %v1032
      %v1034 = vrcp.pop %v822
      %v1035 = vmul.f32 1.0, %v1034
      %v1036 = vrcp.pop %v823
      %v1037 = vmul.f32 1.0, %v1036
      %v1038 = vrcp.pop %v824
      %v1039 = vmul.f32 1.0, %v1038
      %v1040 = vrcp.pop %v825
      %v1041 = vmul.f32 1.0, %v1040
      %v1042 = vrcp.pop %v826
      %v1043 = vmul.f32 1.0, %v1042
      %v1044 = vrcp.pop %v827
      %v1045 = vmul.f32 1.0, %v1044
      %v1046 = vrcp.pop %v828
      %v1047 = vmul.f32 1.0, %v1046
      %v1048 = vrcp.pop %v829
      %v1049 = vmul.f32 1.0, %v1048
      %v1050 = vrcp.pop %v830
      %v1051 = vmul.f32 1.0, %v1050
      %v1052 = vrcp.pop %v831
      %v1053 = vmul.f32 1.0, %v1052
      %v1054 = vrcp.pop %v832
      %v1055 = vmul.f32 1.0, %v1054
      %v1056 = vrcp.pop %v833
      %v1057 = vmul.f32 1.0, %v1056
      %v1058 = vrcp.pop %v834
      %v1059 = vmul.f32 1.0, %v1058
      %v1060 = vrcp.pop %v835
      %v1061 = vmul.f32 1.0, %v1060
      %v1062 = vrcp.pop %v836
      %v1063 = vmul.f32 1.0, %v1062
      %v1064 = vrcp.pop %v837
      %v1065 = vmul.f32 1.0, %v1064
      %v1066 = vrcp.pop %v838
      %v1067 = vmul.f32 1.0, %v1066
      %v1068 = vrcp.pop %v839
      %v1069 = vmul.f32 1.0, %v1068
      %v1070 = vrcp.pop %v840
      %v1071 = vmul.f32 1.0, %v1070
      %v1072 = vrcp.pop %v841
      %v1073 = vmul.f32 1.0, %v1072
      %v1074 = vrcp.pop %v842
      %v1075 = vmul.f32 1.0, %v1074
      %v1076 = vrcp.pop %v843
      %v1077 = vmul.f32 1.0, %v1076
      %v1078 = vrcp.pop %v844
      %v1079 = vmul.f32 1.0, %v1078
      %v1080 = vrcp.pop %v845
      %v1081 = vmul.f32 1.0, %v1080
      %v1082 = vrcp.pop %v846
      %v1083 = vmul.f32 1.0, %v1082
      %v1084 = vrcp.pop %v847
      %v1085 = vmul.f32 1.0, %v1084
      %v1086 = vrcp.pop %v848
      %v1087 = vmul.f32 1.0, %v1086
      %v1088 = vrcp.pop %v849
      %v1089 = vmul.f32 1.0, %v1088
      %v1090 = vrcp.pop %v850
      %v1091 = vmul.f32 1.0, %v1090
      %v1092 = vrcp.pop %v851
      %v1093 = vmul.f32 1.0, %v1092
      %v1094 = vrcp.pop %v852
      %v1095 = vmul.f32 1.0, %v1094
      %v1096 = vrcp.pop %v853
      %v1097 = vmul.f32 1.0, %v1096
      %v1098 = vrcp.pop %v854
      %v1099 = vmul.f32 1.0, %v1098
      %v1100 = vrcp.pop %v855
      %v1101 = vmul.f32 1.0, %v1100
      %v1102 = vrcp.pop %v856
      %v1103 = vmul.f32 1.0, %v1102
      %v1104 = vrcp.pop %v857
      %v1105 = vmul.f32 1.0, %v1104
      %v1106 = vrcp.pop %v858
      %v1107 = vmul.f32 1.0, %v1106
      %v1108 = vrcp.pop %v859
      %v1109 = vmul.f32 1.0, %v1108
      %v1110 = vrcp.pop %v860
      %v1111 = vmul.f32 1.0, %v1110
      %v1112 = vrcp.pop %v861
      %v1113 = vmul.f32 1.0, %v1112
      %v1114 = vrcp.pop %v862
      %v1115 = vmul.f32 1.0, %v1114
      %v1116 = vrcp.pop %v863
      %v1117 = vmul.f32 1.0, %v1116
      %v1118 = vrcp.pop %v864
      %v1119 = vmul.f32 1.0, %v1118
      %v1120 = vrcp.pop %v865
      %v1121 = vmul.f32 1.0, %v1120
      %v1122 = vrcp.pop %v866
      %v1123 = vmul.f32 1.0, %v1122
      %v1124 = vrcp.pop %v867
      %v1125 = vmul.f32 1.0, %v1124
      %v1126 = vrcp.pop %v868
      %v1127 = vmul.f32 1.0, %v1126
      %v1128 = vrcp.pop %v869
      %v1129 = vmul.f32 1.0, %v1128
      %v1130 = vrcp.pop %v870
      %v1131 = vmul.f32 1.0, %v1130
      %v1132 = vrcp.pop %v871
      %v1133 = vmul.f32 1.0, %v1132
      %v1134 = vrcp.pop %v872
      %v1135 = vmul.f32 1.0, %v1134
      %v1136 = vrcp.pop %v873
      %v1137 = vmul.f32 1.0, %v1136
      %v1138 = vrcp.pop %v874
      %v1139 = vmul.f32 1.0, %v1138
      %v1140 = vrcp.pop %v875
      %v1141 = vmul.f32 1.0, %v1140
      %v1142 = vrcp.pop %v876
      %v1143 = vmul.f32 1.0, %v1142
      %v1144 = vrcp.pop %v877
      %v1145 = vmul.f32 1.0, %v1144
      %v1146 = vrcp.pop %v878
      %v1147 = vmul.f32 1.0, %v1146
      %v1148 = vrcp.pop %v879
      %v1149 = vmul.f32 1.0, %v1148
      %v1150 = vrcp.pop %v880
      %v1151 = vmul.f32 1.0, %v1150
      %v1152 = vrcp.pop %v881
      %v1153 = vmul.f32 1.0, %v1152
      %v1154 = vrcp.pop %v882
      %v1155 = vmul.f32 1.0, %v1154
      %v1156 = vrcp.pop %v883
      %v1157 = vmul.f32 1.0, %v1156
      %v1158 = vrcp.pop %v884
      %v1159 = vmul.f32 1.0, %v1158
      %v1160 = vrcp.pop %v885
      %v1161 = vmul.f32 1.0, %v1160
      %v1162 = vrcp.pop %v886
      %v1163 = vmul.f32 1.0, %v1162
      %v1164 = vrcp.pop %v887
      %v1165 = vmul.f32 1.0, %v1164
      %v1166 = vrcp.pop %v888
      %v1167 = vmul.f32 1.0, %v1166
      %v1168 = vrcp.pop %v889
      %v1169 = vmul.f32 1.0, %v1168
      %v1170 = vrcp.pop %v890
      %v1171 = vmul.f32 1.0, %v1170
      %v1172 = vrcp.pop %v891
      %v1173 = vmul.f32 1.0, %v1172
      %v1174 = vrcp.pop %v892
      %v1175 = vmul.f32 1.0, %v1174
      %v1176 = vrcp.pop %v893
      %v1177 = vmul.f32 1.0, %v1176
      %v1178 = vrcp.pop %v894
      %v1179 = vmul.f32 1.0, %v1178
      %v1180 = vrcp.pop %v895
      %v1181 = vmul.f32 1.0, %v1180
      %v1182 = vrcp.pop %v896
      %v1183 = vmul.f32 1.0, %v1182
      %v1184 = vrcp.pop %v897
      %v1185 = vmul.f32 1.0, %v1184
      %v1186 = vld [vmem:[%s0] sm:$0xff]
      %v1187 = vld [vmem:[%s0 + $0x8] sm:$0xff]
      %v1188 = vld [vmem:[%s0 + $0x10] sm:$0xff]
      %v1189 = vld [vmem:[%s0 + $0x18] sm:$0xff]
      %v1190 = vld [vmem:[%s0 + $0x20] sm:$0xff]
      %v1191 = vld [vmem:[%s0 + $0x28] sm:$0xff]
      %v1192 = vld [vmem:[%s0 + $0x30] sm:$0xff]
      %v1193 = vld [vmem:[%s0 + $0x38] sm:$0xff]
      %v1194 = vld [vmem:[%s0 + $0x40] sm:$0xff]
      %v1195 = vld [vmem:[%s0 + $0x48] sm:$0xff]
      %v1196 = vld [vmem:[%s0 + $0x50] sm:$0xff]
      %v1197 = vld [vmem:[%s0 + $0x58] sm:$0xff]
      %v1198 = vld [vmem:[%s0 + $0x60] sm:$0xff]
      %v1199 = vld [vmem:[%s0 + $0x68] sm:$0xff]
      %v1200 = vld [vmem:[%s0 + $0x70] sm:$0xff]
      %v1201 = vld [vmem:[%s0 + $0x78] sm:$0xff]
      %v1202 = vld [vmem:[%s0 + $0x80] sm:$0xff]
      %v1203 = vld [vmem:[%s0 + $0x88] sm:$0xff]
      %v1204 = vld [vmem:[%s0 + $0x90] sm:$0xff]
      %v1205 = vld [vmem:[%s0 + $0x98] sm:$0xff]
      %v1206 = vld [vmem:[%s0 + $0xa0] sm:$0xff]
      %v1207 = vld [vmem:[%s0 + $0xa8] sm:$0xff]
      %v1208 = vld [vmem:[%s0 + $0xb0] sm:$0xff]
      %v1209 = vld [vmem:[%s0 + $0xb8] sm:$0xff]
      %v1210 = vld [vmem:[%s0 + $0xc0] sm:$0xff]
      %v1211 = vld [vmem:[%s0 + $0xc8] sm:$0xff]
      %v1212 = vld [vmem:[%s0 + $0xd0] sm:$0xff]
      %v1213 = vld [vmem:[%s0 + $0xd8] sm:$0xff]
      %v1214 = vld [vmem:[%s0 + $0xe0] sm:$0xff]
      %v1215 = vld [vmem:[%s0 + $0xe8] sm:$0xff]
      %v1216 = vld [vmem:[%s0 + $0xf0] sm:$0xff]
      %v1217 = vld [vmem:[%s0 + $0xf8] sm:$0xff]
      %v1218 = vld [vmem:[%s0 + $0x100] sm:$0xff]
      %v1219 = vld [vmem:[%s0 + $0x108] sm:$0xff]
      %v1220 = vld [vmem:[%s0 + $0x110] sm:$0xff]
      %v1221 = vld [vmem:[%s0 + $0x118] sm:$0xff]
      %v1222 = vld [vmem:[%s0 + $0x120] sm:$0xff]
      %v1223 = vld [vmem:[%s0 + $0x128] sm:$0xff]
      %v1224 = vld [vmem:[%s0 + $0x130] sm:$0xff]
      %v1225 = vld [vmem:[%s0 + $0x138] sm:$0xff]
      %v1226 = vld [vmem:[%s0 + $0x140] sm:$0xff]
      %v1227 = vld [vmem:[%s0 + $0x148] sm:$0xff]
      %v1228 = vld [vmem:[%s0 + $0x150] sm:$0xff]
      %v1229 = vld [vmem:[%s0 + $0x158] sm:$0xff]
      %v1230 = vld [vmem:[%s0 + $0x160] sm:$0xff]
      %v1231 = vld [vmem:[%s0 + $0x168] sm:$0xff]
      %v1232 = vld [vmem:[%s0 + $0x170] sm:$0xff]
      %v1233 = vld [vmem:[%s0 + $0x178] sm:$0xff]
      %v1234 = vld [vmem:[%s0 + $0x180] sm:$0xff]
      %v1235 = vld [vmem:[%s0 + $0x188] sm:$0xff]
      %v1236 = vld [vmem:[%s0 + $0x190] sm:$0xff]
      %v1237 = vld [vmem:[%s0 + $0x198] sm:$0xff]
      %v1238 = vld [vmem:[%s0 + $0x1a0] sm:$0xff]
      %v1239 = vld [vmem:[%s0 + $0x1a8] sm:$0xff]
      %v1240 = vld [vmem:[%s0 + $0x1b0] sm:$0xff]
      %v1241 = vld [vmem:[%s0 + $0x1b8] sm:$0xff]
      %v1242 = vld [vmem:[%s0 + $0x1c0] sm:$0xff]
      %v1243 = vld [vmem:[%s0 + $0x1c8] sm:$0xff]
      %v1244 = vld [vmem:[%s0 + $0x1d0] sm:$0xff]
      %v1245 = vld [vmem:[%s0 + $0x1d8] sm:$0xff]
      %v1246 = vld [vmem:[%s0 + $0x1e0] sm:$0xff]
      %v1247 = vld [vmem:[%s0 + $0x1e8] sm:$0xff]
      %v1248 = vld [vmem:[%s0 + $0x1f0] sm:$0xff]
      %v1249 = vld [vmem:[%s0 + $0x1f8] sm:$0xff]
      %v1250 = vld [vmem:[%s0 + $0x200] sm:$0xff]
      %v1251 = vld [vmem:[%s0 + $0x208] sm:$0xff]
      %v1252 = vld [vmem:[%s0 + $0x210] sm:$0xff]
      %v1253 = vld [vmem:[%s0 + $0x218] sm:$0xff]
      %v1254 = vld [vmem:[%s0 + $0x220] sm:$0xff]
      %v1255 = vld [vmem:[%s0 + $0x228] sm:$0xff]
      %v1256 = vld [vmem:[%s0 + $0x230] sm:$0xff]
      %v1257 = vld [vmem:[%s0 + $0x238] sm:$0xff]
      %v1258 = vld [vmem:[%s0 + $0x240] sm:$0xff]
      %v1259 = vld [vmem:[%s0 + $0x248] sm:$0xff]
      %v1260 = vld [vmem:[%s0 + $0x250] sm:$0xff]
      %v1261 = vld [vmem:[%s0 + $0x258] sm:$0xff]
      %v1262 = vld [vmem:[%s0 + $0x260] sm:$0xff]
      %v1263 = vld [vmem:[%s0 + $0x268] sm:$0xff]
      %v1264 = vld [vmem:[%s0 + $0x270] sm:$0xff]
      %v1265 = vld [vmem:[%s0 + $0x278] sm:$0xff]
      %v1266 = vld [vmem:[%s0 + $0x280] sm:$0xff]
      %v1267 = vld [vmem:[%s0 + $0x288] sm:$0xff]
      %v1268 = vld [vmem:[%s0 + $0x290] sm:$0xff]
      %v1269 = vld [vmem:[%s0 + $0x298] sm:$0xff]
      %v1270 = vld [vmem:[%s0 + $0x2a0] sm:$0xff]
      %v1271 = vld [vmem:[%s0 + $0x2a8] sm:$0xff]
      %v1272 = vld [vmem:[%s0 + $0x2b0] sm:$0xff]
      %v1273 = vld [vmem:[%s0 + $0x2b8] sm:$0xff]
      %v1274 = vld [vmem:[%s0 + $0x2c0] sm:$0xff]
      %v1275 = vld [vmem:[%s0 + $0x2c8] sm:$0xff]
      %v1276 = vld [vmem:[%s0 + $0x2d0] sm:$0xff]
      %v1277 = vld [vmem:[%s0 + $0x2d8] sm:$0xff]
      %v1278 = vld [vmem:[%s0 + $0x2e0] sm:$0xff]
      %v1279 = vld [vmem:[%s0 + $0x2e8] sm:$0xff]
      %v1280 = vld [vmem:[%s0 + $0x2f0] sm:$0xff]
      %v1281 = vld [vmem:[%s0 + $0x2f8] sm:$0xff]
      %v1282 = vld [vmem:[%s0 + $0x300] sm:$0xff]
      %v1283 = vld [vmem:[%s0 + $0x308] sm:$0xff]
      %v1284 = vld [vmem:[%s0 + $0x310] sm:$0xff]
      %v1285 = vld [vmem:[%s0 + $0x318] sm:$0xff]
      %v1286 = vld [vmem:[%s0 + $0x320] sm:$0xff]
      %v1287 = vld [vmem:[%s0 + $0x328] sm:$0xff]
      %v1288 = vld [vmem:[%s0 + $0x330] sm:$0xff]
      %v1289 = vld [vmem:[%s0 + $0x338] sm:$0xff]
      %v1290 = vld [vmem:[%s0 + $0x340] sm:$0xff]
      %v1291 = vld [vmem:[%s0 + $0x348] sm:$0xff]
      %v1292 = vld [vmem:[%s0 + $0x350] sm:$0xff]
      %v1293 = vld [vmem:[%s0 + $0x358] sm:$0xff]
      %v1294 = vld [vmem:[%s0 + $0x360] sm:$0xff]
      %v1295 = vld [vmem:[%s0 + $0x368] sm:$0xff]
      %v1296 = vld [vmem:[%s0 + $0x370] sm:$0xff]
      %v1297 = vld [vmem:[%s0 + $0x378] sm:$0xff]
      %v1298 = vld [vmem:[%s0 + $0x380] sm:$0xff]
      %v1299 = vld [vmem:[%s0 + $0x388] sm:$0xff]
      %v1300 = vld [vmem:[%s0 + $0x390] sm:$0xff]
      %v1301 = vld [vmem:[%s0 + $0x398] sm:$0xff]
      %v1302 = vld [vmem:[%s0 + $0x3a0] sm:$0xff]
      %v1303 = vld [vmem:[%s0 + $0x3a8] sm:$0xff]
      %v1304 = vld [vmem:[%s0 + $0x3b0] sm:$0xff]
      %v1305 = vld [vmem:[%s0 + $0x3b8] sm:$0xff]
      %v1306 = vld [vmem:[%s0 + $0x3c0] sm:$0xff]
      %v1307 = vld [vmem:[%s0 + $0x3c8] sm:$0xff]
      %v1308 = vld [vmem:[%s0 + $0x3d0] sm:$0xff]
      %v1309 = vld [vmem:[%s0 + $0x3d8] sm:$0xff]
      %v1310 = vld [vmem:[%s0 + $0x3e0] sm:$0xff]
      %v1311 = vld [vmem:[%s0 + $0x3e8] sm:$0xff]
      %v1312 = vld [vmem:[%s0 + $0x3f0] sm:$0xff]
      %v1313 = vld [vmem:[%s0 + $0x3f8] sm:$0xff]
      %v1314 = vld [vmem:[%s0 + $0x400] sm:$0xff]
      %v1315 = vld [vmem:[%s0 + $0x408] sm:$0xff]
      %v1316 = vld [vmem:[%s0 + $0x410] sm:$0xff]
      %v1317 = vld [vmem:[%s0 + $0x418] sm:$0xff]
      %v1318 = vld [vmem:[%s0 + $0x420] sm:$0xff]
      %v1319 = vld [vmem:[%s0 + $0x428] sm:$0xff]
      %v1320 = vld [vmem:[%s0 + $0x430] sm:$0xff]
      %v1321 = vld [vmem:[%s0 + $0x438] sm:$0xff]
      %v1322 = vld [vmem:[%s0 + $0x440] sm:$0xff]
      %v1323 = vld [vmem:[%s0 + $0x448] sm:$0xff]
      %v1324 = vld [vmem:[%s0 + $0x450] sm:$0xff]
      %v1325 = vld [vmem:[%s0 + $0x458] sm:$0xff]
      %v1326 = vld [vmem:[%s0 + $0x460] sm:$0xff]
      %v1327 = vld [vmem:[%s0 + $0x468] sm:$0xff]
      %v1328 = vld [vmem:[%s0 + $0x470] sm:$0xff]
      %v1329 = vld [vmem:[%s0 + $0x478] sm:$0xff]
      %1331 = vset.pattern.permute.xlu0 0
      %1332 = vperm.xlu0 %1331, %v899
      %v1333 = vpop.permute.xlu0 %1332
      %1336 = vset.pattern.permute.xlu0 0
      %1337 = vperm.xlu0 %1336, %v901
      %v1338 = vpop.permute.xlu0 %1337
      %1341 = vset.pattern.permute.xlu0 0
      %1342 = vperm.xlu0 %1341, %v903
      %v1343 = vpop.permute.xlu0 %1342
      %1346 = vset.pattern.permute.xlu0 0
      %1347 = vperm.xlu0 %1346, %v905
      %v1348 = vpop.permute.xlu0 %1347
      %1351 = vset.pattern.permute.xlu0 0
      %1352 = vperm.xlu0 %1351, %v907
      %v1353 = vpop.permute.xlu0 %1352
      %1356 = vset.pattern.permute.xlu0 0
      %1357 = vperm.xlu0 %1356, %v909
      %v1358 = vpop.permute.xlu0 %1357
      %1361 = vset.pattern.permute.xlu0 0
      %1362 = vperm.xlu0 %1361, %v911
      %v1363 = vpop.permute.xlu0 %1362
      %1366 = vset.pattern.permute.xlu0 0
      %1367 = vperm.xlu0 %1366, %v913
      %v1368 = vpop.permute.xlu0 %1367
      %1371 = vset.pattern.permute.xlu0 0
      %1372 = vperm.xlu0 %1371, %v915
      %v1373 = vpop.permute.xlu0 %1372
      %1376 = vset.pattern.permute.xlu0 0
      %1377 = vperm.xlu0 %1376, %v917
      %v1378 = vpop.permute.xlu0 %1377
      %1381 = vset.pattern.permute.xlu0 0
      %1382 = vperm.xlu0 %1381, %v919
      %v1383 = vpop.permute.xlu0 %1382
      %1386 = vset.pattern.permute.xlu0 0
      %1387 = vperm.xlu0 %1386, %v921
      %v1388 = vpop.permute.xlu0 %1387
      %1391 = vset.pattern.permute.xlu0 0
      %1392 = vperm.xlu0 %1391, %v923
      %v1393 = vpop.permute.xlu0 %1392
      %1396 = vset.pattern.permute.xlu0 0
      %1397 = vperm.xlu0 %1396, %v925
      %v1398 = vpop.permute.xlu0 %1397
      %1401 = vset.pattern.permute.xlu0 0
      %1402 = vperm.xlu0 %1401, %v927
      %v1403 = vpop.permute.xlu0 %1402
      %1406 = vset.pattern.permute.xlu0 0
      %1407 = vperm.xlu0 %1406, %v929
      %v1408 = vpop.permute.xlu0 %1407
      %1411 = vset.pattern.permute.xlu0 0
      %1412 = vperm.xlu0 %1411, %v931
      %v1413 = vpop.permute.xlu0 %1412
      %1416 = vset.pattern.permute.xlu0 0
      %1417 = vperm.xlu0 %1416, %v933
      %v1418 = vpop.permute.xlu0 %1417
      %1421 = vset.pattern.permute.xlu0 0
      %1422 = vperm.xlu0 %1421, %v935
      %v1423 = vpop.permute.xlu0 %1422
      %1426 = vset.pattern.permute.xlu0 0
      %1427 = vperm.xlu0 %1426, %v937
      %v1428 = vpop.permute.xlu0 %1427
      %1431 = vset.pattern.permute.xlu0 0
      %1432 = vperm.xlu0 %1431, %v939
      %v1433 = vpop.permute.xlu0 %1432
      %1436 = vset.pattern.permute.xlu0 0
      %1437 = vperm.xlu0 %1436, %v941
      %v1438 = vpop.permute.xlu0 %1437
      %1441 = vset.pattern.permute.xlu0 0
      %1442 = vperm.xlu0 %1441, %v943
      %v1443 = vpop.permute.xlu0 %1442
      %1446 = vset.pattern.permute.xlu0 0
      %1447 = vperm.xlu0 %1446, %v945
      %v1448 = vpop.permute.xlu0 %1447
      %1451 = vset.pattern.permute.xlu0 0
      %1452 = vperm.xlu0 %1451, %v947
      %v1453 = vpop.permute.xlu0 %1452
      %1456 = vset.pattern.permute.xlu0 0
      %1457 = vperm.xlu0 %1456, %v949
      %v1458 = vpop.permute.xlu0 %1457
      %1461 = vset.pattern.permute.xlu0 0
      %1462 = vperm.xlu0 %1461, %v951
      %v1463 = vpop.permute.xlu0 %1462
      %1466 = vset.pattern.permute.xlu0 0
      %1467 = vperm.xlu0 %1466, %v953
      %v1468 = vpop.permute.xlu0 %1467
      %1471 = vset.pattern.permute.xlu0 0
      %1472 = vperm.xlu0 %1471, %v955
      %v1473 = vpop.permute.xlu0 %1472
      %1476 = vset.pattern.permute.xlu0 0
      %1477 = vperm.xlu0 %1476, %v957
      %v1478 = vpop.permute.xlu0 %1477
      %1481 = vset.pattern.permute.xlu0 0
      %1482 = vperm.xlu0 %1481, %v959
      %v1483 = vpop.permute.xlu0 %1482
      %1486 = vset.pattern.permute.xlu0 0
      %1487 = vperm.xlu0 %1486, %v961
      %v1488 = vpop.permute.xlu0 %1487
      %1491 = vset.pattern.permute.xlu0 0
      %1492 = vperm.xlu0 %1491, %v963
      %v1493 = vpop.permute.xlu0 %1492
      %1496 = vset.pattern.permute.xlu0 0
      %1497 = vperm.xlu0 %1496, %v965
      %v1498 = vpop.permute.xlu0 %1497
      %1501 = vset.pattern.permute.xlu0 0
      %1502 = vperm.xlu0 %1501, %v967
      %v1503 = vpop.permute.xlu0 %1502
      %1506 = vset.pattern.permute.xlu0 0
      %1507 = vperm.xlu0 %1506, %v969
      %v1508 = vpop.permute.xlu0 %1507
      %1511 = vset.pattern.permute.xlu0 0
      %1512 = vperm.xlu0 %1511, %v971
      %v1513 = vpop.permute.xlu0 %1512
      %1516 = vset.pattern.permute.xlu0 0
      %1517 = vperm.xlu0 %1516, %v973
      %v1518 = vpop.permute.xlu0 %1517
      %1521 = vset.pattern.permute.xlu0 0
      %1522 = vperm.xlu0 %1521, %v975
      %v1523 = vpop.permute.xlu0 %1522
      %1526 = vset.pattern.permute.xlu0 0
      %1527 = vperm.xlu0 %1526, %v977
      %v1528 = vpop.permute.xlu0 %1527
      %1531 = vset.pattern.permute.xlu0 0
      %1532 = vperm.xlu0 %1531, %v979
      %v1533 = vpop.permute.xlu0 %1532
      %1536 = vset.pattern.permute.xlu0 0
      %1537 = vperm.xlu0 %1536, %v981
      %v1538 = vpop.permute.xlu0 %1537
      %1541 = vset.pattern.permute.xlu0 0
      %1542 = vperm.xlu0 %1541, %v983
      %v1543 = vpop.permute.xlu0 %1542
      %1546 = vset.pattern.permute.xlu0 0
      %1547 = vperm.xlu0 %1546, %v985
      %v1548 = vpop.permute.xlu0 %1547
      %1551 = vset.pattern.permute.xlu0 0
      %1552 = vperm.xlu0 %1551, %v987
      %v1553 = vpop.permute.xlu0 %1552
      %1556 = vset.pattern.permute.xlu0 0
      %1557 = vperm.xlu0 %1556, %v989
      %v1558 = vpop.permute.xlu0 %1557
      %1561 = vset.pattern.permute.xlu0 0
      %1562 = vperm.xlu0 %1561, %v991
      %v1563 = vpop.permute.xlu0 %1562
      %1566 = vset.pattern.permute.xlu0 0
      %1567 = vperm.xlu0 %1566, %v993
      %v1568 = vpop.permute.xlu0 %1567
      %1571 = vset.pattern.permute.xlu0 0
      %1572 = vperm.xlu0 %1571, %v995
      %v1573 = vpop.permute.xlu0 %1572
      %1576 = vset.pattern.permute.xlu0 0
      %1577 = vperm.xlu0 %1576, %v997
      %v1578 = vpop.permute.xlu0 %1577
      %1581 = vset.pattern.permute.xlu0 0
      %1582 = vperm.xlu0 %1581, %v999
      %v1583 = vpop.permute.xlu0 %1582
      %1586 = vset.pattern.permute.xlu0 0
      %1587 = vperm.xlu0 %1586, %v1001
      %v1588 = vpop.permute.xlu0 %1587
      %1591 = vset.pattern.permute.xlu0 0
      %1592 = vperm.xlu0 %1591, %v1003
      %v1593 = vpop.permute.xlu0 %1592
      %1596 = vset.pattern.permute.xlu0 0
      %1597 = vperm.xlu0 %1596, %v1005
      %v1598 = vpop.permute.xlu0 %1597
      %1601 = vset.pattern.permute.xlu0 0
      %1602 = vperm.xlu0 %1601, %v1007
      %v1603 = vpop.permute.xlu0 %1602
      %1606 = vset.pattern.permute.xlu0 0
      %1607 = vperm.xlu0 %1606, %v1009
      %v1608 = vpop.permute.xlu0 %1607
      %1611 = vset.pattern.permute.xlu0 0
      %1612 = vperm.xlu0 %1611, %v1011
      %v1613 = vpop.permute.xlu0 %1612
      %1616 = vset.pattern.permute.xlu0 0
      %1617 = vperm.xlu0 %1616, %v1013
      %v1618 = vpop.permute.xlu0 %1617
      %1621 = vset.pattern.permute.xlu0 0
      %1622 = vperm.xlu0 %1621, %v1015
      %v1623 = vpop.permute.xlu0 %1622
      %1626 = vset.pattern.permute.xlu0 0
      %1627 = vperm.xlu0 %1626, %v1017
      %v1628 = vpop.permute.xlu0 %1627
      %1631 = vset.pattern.permute.xlu0 0
      %1632 = vperm.xlu0 %1631, %v1019
      %v1633 = vpop.permute.xlu0 %1632
      %1636 = vset.pattern.permute.xlu0 0
      %1637 = vperm.xlu0 %1636, %v1021
      %v1638 = vpop.permute.xlu0 %1637
      %1641 = vset.pattern.permute.xlu0 0
      %1642 = vperm.xlu0 %1641, %v1023
      %v1643 = vpop.permute.xlu0 %1642
      %1646 = vset.pattern.permute.xlu0 0
      %1647 = vperm.xlu0 %1646, %v1025
      %v1648 = vpop.permute.xlu0 %1647
      %1651 = vset.pattern.permute.xlu0 0
      %1652 = vperm.xlu0 %1651, %v1027
      %v1653 = vpop.permute.xlu0 %1652
      %1656 = vset.pattern.permute.xlu0 0
      %1657 = vperm.xlu0 %1656, %v1029
      %v1658 = vpop.permute.xlu0 %1657
      %1661 = vset.pattern.permute.xlu0 0
      %1662 = vperm.xlu0 %1661, %v1031
      %v1663 = vpop.permute.xlu0 %1662
      %1666 = vset.pattern.permute.xlu0 0
      %1667 = vperm.xlu0 %1666, %v1033
      %v1668 = vpop.permute.xlu0 %1667
      %1671 = vset.pattern.permute.xlu0 0
      %1672 = vperm.xlu0 %1671, %v1035
      %v1673 = vpop.permute.xlu0 %1672
      %1676 = vset.pattern.permute.xlu0 0
      %1677 = vperm.xlu0 %1676, %v1037
      %v1678 = vpop.permute.xlu0 %1677
      %1681 = vset.pattern.permute.xlu0 0
      %1682 = vperm.xlu0 %1681, %v1039
      %v1683 = vpop.permute.xlu0 %1682
      %1686 = vset.pattern.permute.xlu0 0
      %1687 = vperm.xlu0 %1686, %v1041
      %v1688 = vpop.permute.xlu0 %1687
      %1691 = vset.pattern.permute.xlu0 0
      %1692 = vperm.xlu0 %1691, %v1043
      %v1693 = vpop.permute.xlu0 %1692
      %1696 = vset.pattern.permute.xlu0 0
      %1697 = vperm.xlu0 %1696, %v1045
      %v1698 = vpop.permute.xlu0 %1697
      %1701 = vset.pattern.permute.xlu0 0
      %1702 = vperm.xlu0 %1701, %v1047
      %v1703 = vpop.permute.xlu0 %1702
      %1706 = vset.pattern.permute.xlu0 0
      %1707 = vperm.xlu0 %1706, %v1049
      %v1708 = vpop.permute.xlu0 %1707
      %1711 = vset.pattern.permute.xlu0 0
      %1712 = vperm.xlu0 %1711, %v1051
      %v1713 = vpop.permute.xlu0 %1712
      %1716 = vset.pattern.permute.xlu0 0
      %1717 = vperm.xlu0 %1716, %v1053
      %v1718 = vpop.permute.xlu0 %1717
      %1721 = vset.pattern.permute.xlu0 0
      %1722 = vperm.xlu0 %1721, %v1055
      %v1723 = vpop.permute.xlu0 %1722
      %1726 = vset.pattern.permute.xlu0 0
      %1727 = vperm.xlu0 %1726, %v1057
      %v1728 = vpop.permute.xlu0 %1727
      %1731 = vset.pattern.permute.xlu0 0
      %1732 = vperm.xlu0 %1731, %v1059
      %v1733 = vpop.permute.xlu0 %1732
      %1736 = vset.pattern.permute.xlu0 0
      %1737 = vperm.xlu0 %1736, %v1061
      %v1738 = vpop.permute.xlu0 %1737
      %1741 = vset.pattern.permute.xlu0 0
      %1742 = vperm.xlu0 %1741, %v1063
      %v1743 = vpop.permute.xlu0 %1742
      %1746 = vset.pattern.permute.xlu0 0
      %1747 = vperm.xlu0 %1746, %v1065
      %v1748 = vpop.permute.xlu0 %1747
      %1751 = vset.pattern.permute.xlu0 0
      %1752 = vperm.xlu0 %1751, %v1067
      %v1753 = vpop.permute.xlu0 %1752
      %1756 = vset.pattern.permute.xlu0 0
      %1757 = vperm.xlu0 %1756, %v1069
      %v1758 = vpop.permute.xlu0 %1757
      %1761 = vset.pattern.permute.xlu0 0
      %1762 = vperm.xlu0 %1761, %v1071
      %v1763 = vpop.permute.xlu0 %1762
      %1766 = vset.pattern.permute.xlu0 0
      %1767 = vperm.xlu0 %1766, %v1073
      %v1768 = vpop.permute.xlu0 %1767
      %1771 = vset.pattern.permute.xlu0 0
      %1772 = vperm.xlu0 %1771, %v1075
      %v1773 = vpop.permute.xlu0 %1772
      %1776 = vset.pattern.permute.xlu0 0
      %1777 = vperm.xlu0 %1776, %v1077
      %v1778 = vpop.permute.xlu0 %1777
      %1781 = vset.pattern.permute.xlu0 0
      %1782 = vperm.xlu0 %1781, %v1079
      %v1783 = vpop.permute.xlu0 %1782
      %1786 = vset.pattern.permute.xlu0 0
      %1787 = vperm.xlu0 %1786, %v1081
      %v1788 = vpop.permute.xlu0 %1787
      %1791 = vset.pattern.permute.xlu0 0
      %1792 = vperm.xlu0 %1791, %v1083
      %v1793 = vpop.permute.xlu0 %1792
      %1796 = vset.pattern.permute.xlu0 0
      %1797 = vperm.xlu0 %1796, %v1085
      %v1798 = vpop.permute.xlu0 %1797
      %1801 = vset.pattern.permute.xlu0 0
      %1802 = vperm.xlu0 %1801, %v1087
      %v1803 = vpop.permute.xlu0 %1802
      %1806 = vset.pattern.permute.xlu0 0
      %1807 = vperm.xlu0 %1806, %v1089
      %v1808 = vpop.permute.xlu0 %1807
      %1811 = vset.pattern.permute.xlu0 0
      %1812 = vperm.xlu0 %1811, %v1091
      %v1813 = vpop.permute.xlu0 %1812
      %1816 = vset.pattern.permute.xlu0 0
      %1817 = vperm.xlu0 %1816, %v1093
      %v1818 = vpop.permute.xlu0 %1817
      %1821 = vset.pattern.permute.xlu0 0
      %1822 = vperm.xlu0 %1821, %v1095
      %v1823 = vpop.permute.xlu0 %1822
      %1826 = vset.pattern.permute.xlu0 0
      %1827 = vperm.xlu0 %1826, %v1097
      %v1828 = vpop.permute.xlu0 %1827
      %1831 = vset.pattern.permute.xlu0 0
      %1832 = vperm.xlu0 %1831, %v1099
      %v1833 = vpop.permute.xlu0 %1832
      %1836 = vset.pattern.permute.xlu0 0
      %1837 = vperm.xlu0 %1836, %v1101
      %v1838 = vpop.permute.xlu0 %1837
      %1841 = vset.pattern.permute.xlu0 0
      %1842 = vperm.xlu0 %1841, %v1103
      %v1843 = vpop.permute.xlu0 %1842
      %1846 = vset.pattern.permute.xlu0 0
      %1847 = vperm.xlu0 %1846, %v1105
      %v1848 = vpop.permute.xlu0 %1847
      %1851 = vset.pattern.permute.xlu0 0
      %1852 = vperm.xlu0 %1851, %v1107
      %v1853 = vpop.permute.xlu0 %1852
      %1856 = vset.pattern.permute.xlu0 0
      %1857 = vperm.xlu0 %1856, %v1109
      %v1858 = vpop.permute.xlu0 %1857
      %1861 = vset.pattern.permute.xlu0 0
      %1862 = vperm.xlu0 %1861, %v1111
      %v1863 = vpop.permute.xlu0 %1862
      %1866 = vset.pattern.permute.xlu0 0
      %1867 = vperm.xlu0 %1866, %v1113
      %v1868 = vpop.permute.xlu0 %1867
      %1871 = vset.pattern.permute.xlu0 0
      %1872 = vperm.xlu0 %1871, %v1115
      %v1873 = vpop.permute.xlu0 %1872
      %1876 = vset.pattern.permute.xlu0 0
      %1877 = vperm.xlu0 %1876, %v1117
      %v1878 = vpop.permute.xlu0 %1877
      %1881 = vset.pattern.permute.xlu0 0
      %1882 = vperm.xlu0 %1881, %v1119
      %v1883 = vpop.permute.xlu0 %1882
      %1886 = vset.pattern.permute.xlu0 0
      %1887 = vperm.xlu0 %1886, %v1121
      %v1888 = vpop.permute.xlu0 %1887
      %1891 = vset.pattern.permute.xlu0 0
      %1892 = vperm.xlu0 %1891, %v1123
      %v1893 = vpop.permute.xlu0 %1892
      %1896 = vset.pattern.permute.xlu0 0
      %1897 = vperm.xlu0 %1896, %v1125
      %v1898 = vpop.permute.xlu0 %1897
      %1901 = vset.pattern.permute.xlu0 0
      %1902 = vperm.xlu0 %1901, %v1127
      %v1903 = vpop.permute.xlu0 %1902
      %1906 = vset.pattern.permute.xlu0 0
      %1907 = vperm.xlu0 %1906, %v1129
      %v1908 = vpop.permute.xlu0 %1907
      %1911 = vset.pattern.permute.xlu0 0
      %1912 = vperm.xlu0 %1911, %v1131
      %v1913 = vpop.permute.xlu0 %1912
      %1916 = vset.pattern.permute.xlu0 0
      %1917 = vperm.xlu0 %1916, %v1133
      %v1918 = vpop.permute.xlu0 %1917
      %1921 = vset.pattern.permute.xlu0 0
      %1922 = vperm.xlu0 %1921, %v1135
      %v1923 = vpop.permute.xlu0 %1922
      %1926 = vset.pattern.permute.xlu0 0
      %1927 = vperm.xlu0 %1926, %v1137
      %v1928 = vpop.permute.xlu0 %1927
      %1931 = vset.pattern.permute.xlu0 0
      %1932 = vperm.xlu0 %1931, %v1139
      %v1933 = vpop.permute.xlu0 %1932
      %1936 = vset.pattern.permute.xlu0 0
      %1937 = vperm.xlu0 %1936, %v1141
      %v1938 = vpop.permute.xlu0 %1937
      %1941 = vset.pattern.permute.xlu0 0
      %1942 = vperm.xlu0 %1941, %v1143
      %v1943 = vpop.permute.xlu0 %1942
      %1946 = vset.pattern.permute.xlu0 0
      %1947 = vperm.xlu0 %1946, %v1145
      %v1948 = vpop.permute.xlu0 %1947
      %1951 = vset.pattern.permute.xlu0 0
      %1952 = vperm.xlu0 %1951, %v1147
      %v1953 = vpop.permute.xlu0 %1952
      %1956 = vset.pattern.permute.xlu0 0
      %1957 = vperm.xlu0 %1956, %v1149
      %v1958 = vpop.permute.xlu0 %1957
      %1961 = vset.pattern.permute.xlu0 0
      %1962 = vperm.xlu0 %1961, %v1151
      %v1963 = vpop.permute.xlu0 %1962
      %1966 = vset.pattern.permute.xlu0 0
      %1967 = vperm.xlu0 %1966, %v1153
      %v1968 = vpop.permute.xlu0 %1967
      %1971 = vset.pattern.permute.xlu0 0
      %1972 = vperm.xlu0 %1971, %v1155
      %v1973 = vpop.permute.xlu0 %1972
      %1976 = vset.pattern.permute.xlu0 0
      %1977 = vperm.xlu0 %1976, %v1157
      %v1978 = vpop.permute.xlu0 %1977
      %1981 = vset.pattern.permute.xlu0 0
      %1982 = vperm.xlu0 %1981, %v1159
      %v1983 = vpop.permute.xlu0 %1982
      %1986 = vset.pattern.permute.xlu0 0
      %1987 = vperm.xlu0 %1986, %v1161
      %v1988 = vpop.permute.xlu0 %1987
      %1991 = vset.pattern.permute.xlu0 0
      %1992 = vperm.xlu0 %1991, %v1163
      %v1993 = vpop.permute.xlu0 %1992
      %1996 = vset.pattern.permute.xlu0 0
      %1997 = vperm.xlu0 %1996, %v1165
      %v1998 = vpop.permute.xlu0 %1997
      %2001 = vset.pattern.permute.xlu0 0
      %2002 = vperm.xlu0 %2001, %v1167
      %v2003 = vpop.permute.xlu0 %2002
      %2006 = vset.pattern.permute.xlu0 0
      %2007 = vperm.xlu0 %2006, %v1169
      %v2008 = vpop.permute.xlu0 %2007
      %2011 = vset.pattern.permute.xlu0 0
      %2012 = vperm.xlu0 %2011, %v1171
      %v2013 = vpop.permute.xlu0 %2012
      %2016 = vset.pattern.permute.xlu0 0
      %2017 = vperm.xlu0 %2016, %v1173
      %v2018 = vpop.permute.xlu0 %2017
      %2021 = vset.pattern.permute.xlu0 0
      %2022 = vperm.xlu0 %2021, %v1175
      %v2023 = vpop.permute.xlu0 %2022
      %2026 = vset.pattern.permute.xlu0 0
      %2027 = vperm.xlu0 %2026, %v1177
      %v2028 = vpop.permute.xlu0 %2027
      %2031 = vset.pattern.permute.xlu0 0
      %2032 = vperm.xlu0 %2031, %v1179
      %v2033 = vpop.permute.xlu0 %2032
      %2036 = vset.pattern.permute.xlu0 0
      %2037 = vperm.xlu0 %2036, %v1181
      %v2038 = vpop.permute.xlu0 %2037
      %2041 = vset.pattern.permute.xlu0 0
      %2042 = vperm.xlu0 %2041, %v1183
      %v2043 = vpop.permute.xlu0 %2042
      %2046 = vset.pattern.permute.xlu0 0
      %2047 = vperm.xlu0 %2046, %v1185
      %v2048 = vpop.permute.xlu0 %2047
      %v2050 = vmul.f32 %v1186, %v1333
      %v2051 = vmul.f32 %v1187, %v1338
      %v2052 = vmul.f32 %v1188, %v1343
      %v2053 = vmul.f32 %v1189, %v1348
      %v2054 = vmul.f32 %v1190, %v1353
      %v2055 = vmul.f32 %v1191, %v1358
      %v2056 = vmul.f32 %v1192, %v1363
      %v2057 = vmul.f32 %v1193, %v1368
      %v2058 = vmul.f32 %v1194, %v1373
      %v2059 = vmul.f32 %v1195, %v1378
      %v2060 = vmul.f32 %v1196, %v1383
      %v2061 = vmul.f32 %v1197, %v1388
      %v2062 = vmul.f32 %v1198, %v1393
      %v2063 = vmul.f32 %v1199, %v1398
      %v2064 = vmul.f32 %v1200, %v1403
      %v2065 = vmul.f32 %v1201, %v1408
      %v2066 = vmul.f32 %v1202, %v1413
      %v2067 = vmul.f32 %v1203, %v1418
      %v2068 = vmul.f32 %v1204, %v1423
      %v2069 = vmul.f32 %v1205, %v1428
      %v2070 = vmul.f32 %v1206, %v1433
      %v2071 = vmul.f32 %v1207, %v1438
      %v2072 = vmul.f32 %v1208, %v1443
      %v2073 = vmul.f32 %v1209, %v1448
      %v2074 = vmul.f32 %v1210, %v1453
      %v2075 = vmul.f32 %v1211, %v1458
      %v2076 = vmul.f32 %v1212, %v1463
      %v2077 = vmul.f32 %v1213, %v1468
      %v2078 = vmul.f32 %v1214, %v1473
      %v2079 = vmul.f32 %v1215, %v1478
      %v2080 = vmul.f32 %v1216, %v1483
      %v2081 = vmul.f32 %v1217, %v1488
      %v2082 = vmul.f32 %v1218, %v1493
      %v2083 = vmul.f32 %v1219, %v1498
      %v2084 = vmul.f32 %v1220, %v1503
      %v2085 = vmul.f32 %v1221, %v1508
      %v2086 = vmul.f32 %v1222, %v1513
      %v2087 = vmul.f32 %v1223, %v1518
      %v2088 = vmul.f32 %v1224, %v1523
      %v2089 = vmul.f32 %v1225, %v1528
      %v2090 = vmul.f32 %v1226, %v1533
      %v2091 = vmul.f32 %v1227, %v1538
      %v2092 = vmul.f32 %v1228, %v1543
      %v2093 = vmul.f32 %v1229, %v1548
      %v2094 = vmul.f32 %v1230, %v1553
      %v2095 = vmul.f32 %v1231, %v1558
      %v2096 = vmul.f32 %v1232, %v1563
      %v2097 = vmul.f32 %v1233, %v1568
      %v2098 = vmul.f32 %v1234, %v1573
      %v2099 = vmul.f32 %v1235, %v1578
      %v2100 = vmul.f32 %v1236, %v1583
      %v2101 = vmul.f32 %v1237, %v1588
      %v2102 = vmul.f32 %v1238, %v1593
      %v2103 = vmul.f32 %v1239, %v1598
      %v2104 = vmul.f32 %v1240, %v1603
      %v2105 = vmul.f32 %v1241, %v1608
      %v2106 = vmul.f32 %v1242, %v1613
      %v2107 = vmul.f32 %v1243, %v1618
      %v2108 = vmul.f32 %v1244, %v1623
      %v2109 = vmul.f32 %v1245, %v1628
      %v2110 = vmul.f32 %v1246, %v1633
      %v2111 = vmul.f32 %v1247, %v1638
      %v2112 = vmul.f32 %v1248, %v1643
      %v2113 = vmul.f32 %v1249, %v1648
      %v2114 = vmul.f32 %v1250, %v1653
      %v2115 = vmul.f32 %v1251, %v1658
      %v2116 = vmul.f32 %v1252, %v1663
      %v2117 = vmul.f32 %v1253, %v1668
      %v2118 = vmul.f32 %v1254, %v1673
      %v2119 = vmul.f32 %v1255, %v1678
      %v2120 = vmul.f32 %v1256, %v1683
      %v2121 = vmul.f32 %v1257, %v1688
      %v2122 = vmul.f32 %v1258, %v1693
      %v2123 = vmul.f32 %v1259, %v1698
      %v2124 = vmul.f32 %v1260, %v1703
      %v2125 = vmul.f32 %v1261, %v1708
      %v2126 = vmul.f32 %v1262, %v1713
      %v2127 = vmul.f32 %v1263, %v1718
      %v2128 = vmul.f32 %v1264, %v1723
      %v2129 = vmul.f32 %v1265, %v1728
      %v2130 = vmul.f32 %v1266, %v1733
      %v2131 = vmul.f32 %v1267, %v1738
      %v2132 = vmul.f32 %v1268, %v1743
      %v2133 = vmul.f32 %v1269, %v1748
      %v2134 = vmul.f32 %v1270, %v1753
      %v2135 = vmul.f32 %v1271, %v1758
      %v2136 = vmul.f32 %v1272, %v1763
      %v2137 = vmul.f32 %v1273, %v1768
      %v2138 = vmul.f32 %v1274, %v1773
      %v2139 = vmul.f32 %v1275, %v1778
      %v2140 = vmul.f32 %v1276, %v1783
      %v2141 = vmul.f32 %v1277, %v1788
      %v2142 = vmul.f32 %v1278, %v1793
      %v2143 = vmul.f32 %v1279, %v1798
      %v2144 = vmul.f32 %v1280, %v1803
      %v2145 = vmul.f32 %v1281, %v1808
      %v2146 = vmul.f32 %v1282, %v1813
      %v2147 = vmul.f32 %v1283, %v1818
      %v2148 = vmul.f32 %v1284, %v1823
      %v2149 = vmul.f32 %v1285, %v1828
      %v2150 = vmul.f32 %v1286, %v1833
      %v2151 = vmul.f32 %v1287, %v1838
      %v2152 = vmul.f32 %v1288, %v1843
      %v2153 = vmul.f32 %v1289, %v1848
      %v2154 = vmul.f32 %v1290, %v1853
      %v2155 = vmul.f32 %v1291, %v1858
      %v2156 = vmul.f32 %v1292, %v1863
      %v2157 = vmul.f32 %v1293, %v1868
      %v2158 = vmul.f32 %v1294, %v1873
      %v2159 = vmul.f32 %v1295, %v1878
      %v2160 = vmul.f32 %v1296, %v1883
      %v2161 = vmul.f32 %v1297, %v1888
      %v2162 = vmul.f32 %v1298, %v1893
      %v2163 = vmul.f32 %v1299, %v1898
      %v2164 = vmul.f32 %v1300, %v1903
      %v2165 = vmul.f32 %v1301, %v1908
      %v2166 = vmul.f32 %v1302, %v1913
      %v2167 = vmul.f32 %v1303, %v1918
      %v2168 = vmul.f32 %v1304, %v1923
      %v2169 = vmul.f32 %v1305, %v1928
      %v2170 = vmul.f32 %v1306, %v1933
      %v2171 = vmul.f32 %v1307, %v1938
      %v2172 = vmul.f32 %v1308, %v1943
      %v2173 = vmul.f32 %v1309, %v1948
      %v2174 = vmul.f32 %v1310, %v1953
      %v2175 = vmul.f32 %v1311, %v1958
      %v2176 = vmul.f32 %v1312, %v1963
      %v2177 = vmul.f32 %v1313, %v1968
      %v2178 = vmul.f32 %v1314, %v1973
      %v2179 = vmul.f32 %v1315, %v1978
      %v2180 = vmul.f32 %v1316, %v1983
      %v2181 = vmul.f32 %v1317, %v1988
      %v2182 = vmul.f32 %v1318, %v1993
      %v2183 = vmul.f32 %v1319, %v1998
      %v2184 = vmul.f32 %v1320, %v2003
      %v2185 = vmul.f32 %v1321, %v2008
      %v2186 = vmul.f32 %v1322, %v2013
      %v2187 = vmul.f32 %v1323, %v2018
      %v2188 = vmul.f32 %v1324, %v2023
      %v2189 = vmul.f32 %v1325, %v2028
      %v2190 = vmul.f32 %v1326, %v2033
      %v2191 = vmul.f32 %v1327, %v2038
      %v2192 = vmul.f32 %v1328, %v2043
      %v2193 = vmul.f32 %v1329, %v2048
      %v2194 = vpack.c.bf16 %v2051, %v2050
      %v2195 = vpack.c.bf16 %v2053, %v2052
      %v2196 = vpack.c.bf16 %v2055, %v2054
      %v2197 = vpack.c.bf16 %v2057, %v2056
      %v2198 = vpack.c.bf16 %v2059, %v2058
      %v2199 = vpack.c.bf16 %v2061, %v2060
      %v2200 = vpack.c.bf16 %v2063, %v2062
      %v2201 = vpack.c.bf16 %v2065, %v2064
      %v2202 = vpack.c.bf16 %v2067, %v2066
      %v2203 = vpack.c.bf16 %v2069, %v2068
      %v2204 = vpack.c.bf16 %v2071, %v2070
      %v2205 = vpack.c.bf16 %v2073, %v2072
      %v2206 = vpack.c.bf16 %v2075, %v2074
      %v2207 = vpack.c.bf16 %v2077, %v2076
      %v2208 = vpack.c.bf16 %v2079, %v2078
      %v2209 = vpack.c.bf16 %v2081, %v2080
      %v2210 = vpack.c.bf16 %v2083, %v2082
      %v2211 = vpack.c.bf16 %v2085, %v2084
      %v2212 = vpack.c.bf16 %v2087, %v2086
      %v2213 = vpack.c.bf16 %v2089, %v2088
      %v2214 = vpack.c.bf16 %v2091, %v2090
      %v2215 = vpack.c.bf16 %v2093, %v2092
      %v2216 = vpack.c.bf16 %v2095, %v2094
      %v2217 = vpack.c.bf16 %v2097, %v2096
      %v2218 = vpack.c.bf16 %v2099, %v2098
      %v2219 = vpack.c.bf16 %v2101, %v2100
      %v2220 = vpack.c.bf16 %v2103, %v2102
      %v2221 = vpack.c.bf16 %v2105, %v2104
      %v2222 = vpack.c.bf16 %v2107, %v2106
      %v2223 = vpack.c.bf16 %v2109, %v2108
      %v2224 = vpack.c.bf16 %v2111, %v2110
      %v2225 = vpack.c.bf16 %v2113, %v2112
      %v2226 = vpack.c.bf16 %v2115, %v2114
      %v2227 = vpack.c.bf16 %v2117, %v2116
      %v2228 = vpack.c.bf16 %v2119, %v2118
      %v2229 = vpack.c.bf16 %v2121, %v2120
      %v2230 = vpack.c.bf16 %v2123, %v2122
      %v2231 = vpack.c.bf16 %v2125, %v2124
      %v2232 = vpack.c.bf16 %v2127, %v2126
      %v2233 = vpack.c.bf16 %v2129, %v2128
      %v2234 = vpack.c.bf16 %v2131, %v2130
      %v2235 = vpack.c.bf16 %v2133, %v2132
      %v2236 = vpack.c.bf16 %v2135, %v2134
      %v2237 = vpack.c.bf16 %v2137, %v2136
      %v2238 = vpack.c.bf16 %v2139, %v2138
      %v2239 = vpack.c.bf16 %v2141, %v2140
      %v2240 = vpack.c.bf16 %v2143, %v2142
      %v2241 = vpack.c.bf16 %v2145, %v2144
      %v2242 = vpack.c.bf16 %v2147, %v2146
      %v2243 = vpack.c.bf16 %v2149, %v2148
      %v2244 = vpack.c.bf16 %v2151, %v2150
      %v2245 = vpack.c.bf16 %v2153, %v2152
      %v2246 = vpack.c.bf16 %v2155, %v2154
      %v2247 = vpack.c.bf16 %v2157, %v2156
      %v2248 = vpack.c.bf16 %v2159, %v2158
      %v2249 = vpack.c.bf16 %v2161, %v2160
      %v2250 = vpack.c.bf16 %v2163, %v2162
      %v2251 = vpack.c.bf16 %v2165, %v2164
      %v2252 = vpack.c.bf16 %v2167, %v2166
      %v2253 = vpack.c.bf16 %v2169, %v2168
      %v2254 = vpack.c.bf16 %v2171, %v2170
      %v2255 = vpack.c.bf16 %v2173, %v2172
      %v2256 = vpack.c.bf16 %v2175, %v2174
      %v2257 = vpack.c.bf16 %v2177, %v2176
      %v2258 = vpack.c.bf16 %v2179, %v2178
      %v2259 = vpack.c.bf16 %v2181, %v2180
      %v2260 = vpack.c.bf16 %v2183, %v2182
      %v2261 = vpack.c.bf16 %v2185, %v2184
      %v2262 = vpack.c.bf16 %v2187, %v2186
      %v2263 = vpack.c.bf16 %v2189, %v2188
      %v2264 = vpack.c.bf16 %v2191, %v2190
      %v2265 = vpack.c.bf16 %v2193, %v2192
      %v2266 = vld [vmem:[%s169] sm:$0xff]
      %v2267 = vld [vmem:[%s169 + $0x8] sm:$0xff]
      %v2268 = vld [vmem:[%s169 + $0x10] sm:$0xff]
      %v2269 = vld [vmem:[%s169 + $0x18] sm:$0xff]
      %v2270 = vld [vmem:[%s169 + $0x20] sm:$0xf]
      %v2271 = vld [vmem:[%s169 + $0x24] sm:$0xff]
      %v2272 = vld [vmem:[%s169 + $0x2c] sm:$0xff]
      %v2273 = vld [vmem:[%s169 + $0x34] sm:$0xff]
      %v2274 = vld [vmem:[%s169 + $0x3c] sm:$0xff]
      %v2275 = vld [vmem:[%s169 + $0x44] sm:$0xf]
      %v2276 = vld [vmem:[%s169 + $0x48] sm:$0xff]
      %v2277 = vld [vmem:[%s169 + $0x50] sm:$0xff]
      %v2278 = vld [vmem:[%s169 + $0x58] sm:$0xff]
      %v2279 = vld [vmem:[%s169 + $0x60] sm:$0xff]
      %v2280 = vld [vmem:[%s169 + $0x68] sm:$0xf]
      %v2281 = vld [vmem:[%s169 + $0x6c] sm:$0xff]
      %v2282 = vld [vmem:[%s169 + $0x74] sm:$0xff]
      %v2283 = vld [vmem:[%s169 + $0x7c] sm:$0xff]
      %v2284 = vld [vmem:[%s169 + $0x84] sm:$0xff]
      %v2285 = vld [vmem:[%s169 + $0x8c] sm:$0xf]
      %v2286 = vld [vmem:[%s169 + $0x90] sm:$0xff]
      %v2287 = vld [vmem:[%s169 + $0x98] sm:$0xff]
      %v2288 = vld [vmem:[%s169 + $0xa0] sm:$0xff]
      %v2289 = vld [vmem:[%s169 + $0xa8] sm:$0xff]
      %v2290 = vld [vmem:[%s169 + $0xb0] sm:$0xf]
      %v2291 = vld [vmem:[%s169 + $0xb4] sm:$0xff]
      %v2292 = vld [vmem:[%s169 + $0xbc] sm:$0xff]
      %v2293 = vld [vmem:[%s169 + $0xc4] sm:$0xff]
      %v2294 = vld [vmem:[%s169 + $0xcc] sm:$0xff]
      %v2295 = vld [vmem:[%s169 + $0xd4] sm:$0xf]
      %v2296 = vld [vmem:[%s169 + $0xd8] sm:$0xff]
      %v2297 = vld [vmem:[%s169 + $0xe0] sm:$0xff]
      %v2298 = vld [vmem:[%s169 + $0xe8] sm:$0xff]
      %v2299 = vld [vmem:[%s169 + $0xf0] sm:$0xff]
      %v2300 = vld [vmem:[%s169 + $0xf8] sm:$0xf]
      %v2301 = vld [vmem:[%s169 + $0xfc] sm:$0xff]
      %v2302 = vld [vmem:[%s169 + $0x104] sm:$0xff]
      %v2303 = vld [vmem:[%s169 + $0x10c] sm:$0xff]
      %v2304 = vld [vmem:[%s169 + $0x114] sm:$0xff]
      %v2305 = vld [vmem:[%s169 + $0x11c] sm:$0xf]
      %v2306 = vld [vmem:[%s169 + $0x120] sm:$0xff]
      %v2307 = vld [vmem:[%s169 + $0x128] sm:$0xff]
      %v2308 = vld [vmem:[%s169 + $0x130] sm:$0xff]
      %v2309 = vld [vmem:[%s169 + $0x138] sm:$0xff]
      %v2310 = vld [vmem:[%s169 + $0x140] sm:$0xf]
      %v2311 = vld [vmem:[%s169 + $0x144] sm:$0xff]
      %v2312 = vld [vmem:[%s169 + $0x14c] sm:$0xff]
      %v2313 = vld [vmem:[%s169 + $0x154] sm:$0xff]
      %v2314 = vld [vmem:[%s169 + $0x15c] sm:$0xff]
      %v2315 = vld [vmem:[%s169 + $0x164] sm:$0xf]
      %v2316 = vld [vmem:[%s169 + $0x168] sm:$0xff]
      %v2317 = vld [vmem:[%s169 + $0x170] sm:$0xff]
      %v2318 = vld [vmem:[%s169 + $0x178] sm:$0xff]
      %v2319 = vld [vmem:[%s169 + $0x180] sm:$0xff]
      %v2320 = vld [vmem:[%s169 + $0x188] sm:$0xf]
      %v2321 = vld [vmem:[%s169 + $0x18c] sm:$0xff]
      %v2322 = vld [vmem:[%s169 + $0x194] sm:$0xff]
      %v2323 = vld [vmem:[%s169 + $0x19c] sm:$0xff]
      %v2324 = vld [vmem:[%s169 + $0x1a4] sm:$0xff]
      %v2325 = vld [vmem:[%s169 + $0x1ac] sm:$0xf]
      %v2326 = vld [vmem:[%s169 + $0x1b0] sm:$0xff]
      %v2327 = vld [vmem:[%s169 + $0x1b8] sm:$0xff]
      %v2328 = vld [vmem:[%s169 + $0x1c0] sm:$0xff]
      %v2329 = vld [vmem:[%s169 + $0x1c8] sm:$0xff]
      %v2330 = vld [vmem:[%s169 + $0x1d0] sm:$0xf]
      %v2331 = vld [vmem:[%s169 + $0x1d4] sm:$0xff]
      %v2332 = vld [vmem:[%s169 + $0x1dc] sm:$0xff]
      %v2333 = vld [vmem:[%s169 + $0x1e4] sm:$0xff]
      %v2334 = vld [vmem:[%s169 + $0x1ec] sm:$0xff]
      %v2335 = vld [vmem:[%s169 + $0x1f4] sm:$0xf]
      %v2336 = vld [vmem:[%s169 + $0x1f8] sm:$0xff]
      %v2337 = vld [vmem:[%s169 + $0x200] sm:$0xff]
      %v2338 = vld [vmem:[%s169 + $0x208] sm:$0xff]
      %v2339 = vld [vmem:[%s169 + $0x210] sm:$0xff]
      %v2340 = vld [vmem:[%s169 + $0x218] sm:$0xf]
      %v2341 = vld [vmem:[%s169 + $0x21c] sm:$0xff]
      %v2342 = vld [vmem:[%s169 + $0x224] sm:$0xff]
      %v2343 = vld [vmem:[%s169 + $0x22c] sm:$0xff]
      %v2344 = vld [vmem:[%s169 + $0x234] sm:$0xff]
      %v2345 = vld [vmem:[%s169 + $0x23c] sm:$0xf]
      %v2346 = vld [vmem:[%s169 + $0x240] sm:$0xff]
      %v2347 = vld [vmem:[%s169 + $0x248] sm:$0xff]
      %v2348 = vld [vmem:[%s169 + $0x250] sm:$0xff]
      %v2349 = vld [vmem:[%s169 + $0x258] sm:$0xff]
      %v2350 = vld [vmem:[%s169 + $0x260] sm:$0xf]
      %v2351 = vld [vmem:[%s169 + $0x264] sm:$0xff]
      %v2352 = vld [vmem:[%s169 + $0x26c] sm:$0xff]
      %v2353 = vld [vmem:[%s169 + $0x274] sm:$0xff]
      %v2354 = vld [vmem:[%s169 + $0x27c] sm:$0xff]
      %v2355 = vld [vmem:[%s169 + $0x284] sm:$0xf]
      %v2356 = vld [vmem:[%s169 + $0x288] sm:$0xff]
      %v2357 = vld [vmem:[%s169 + $0x290] sm:$0xff]
      %v2358 = vld [vmem:[%s169 + $0x298] sm:$0xff]
      %v2359 = vld [vmem:[%s169 + $0x2a0] sm:$0xff]
      %v2360 = vld [vmem:[%s169 + $0x2a8] sm:$0xf]
      %v2361 = vld [vmem:[%s169 + $0x2ac] sm:$0xff]
      %v2362 = vld [vmem:[%s169 + $0x2b4] sm:$0xff]
      %v2363 = vld [vmem:[%s169 + $0x2bc] sm:$0xff]
      %v2364 = vld [vmem:[%s169 + $0x2c4] sm:$0xff]
      %v2365 = vld [vmem:[%s169 + $0x2cc] sm:$0xf]
      %v2466 = vunpack.c.l.b16 %v2266
      %v2467 = vunpack.c.h.b16 %v2266
      %v2468 = vunpack.c.l.b16 %v2267
      %v2469 = vunpack.c.h.b16 %v2267
      %v2470 = vunpack.c.l.b16 %v2268
      %v2471 = vunpack.c.h.b16 %v2268
      %v2472 = vunpack.c.l.b16 %v2269
      %v2473 = vunpack.c.h.b16 %v2269
      %v2474 = vunpack.c.l.b16 %v2270
      %v2475 = vunpack.c.l.b16 %v2271
      %v2476 = vunpack.c.h.b16 %v2271
      %v2477 = vunpack.c.l.b16 %v2272
      %v2478 = vunpack.c.h.b16 %v2272
      %v2479 = vunpack.c.l.b16 %v2273
      %v2480 = vunpack.c.h.b16 %v2273
      %v2481 = vunpack.c.l.b16 %v2274
      %v2482 = vunpack.c.h.b16 %v2274
      %v2483 = vunpack.c.l.b16 %v2275
      %v2484 = vunpack.c.l.b16 %v2276
      %v2485 = vunpack.c.h.b16 %v2276
      %v2486 = vunpack.c.l.b16 %v2277
      %v2487 = vunpack.c.h.b16 %v2277
      %v2488 = vunpack.c.l.b16 %v2278
      %v2489 = vunpack.c.h.b16 %v2278
      %v2490 = vunpack.c.l.b16 %v2279
      %v2491 = vunpack.c.h.b16 %v2279
      %v2492 = vunpack.c.l.b16 %v2280
      %v2493 = vunpack.c.l.b16 %v2281
      %v2494 = vunpack.c.h.b16 %v2281
      %v2495 = vunpack.c.l.b16 %v2282
      %v2496 = vunpack.c.h.b16 %v2282
      %v2497 = vunpack.c.l.b16 %v2283
      %v2498 = vunpack.c.h.b16 %v2283
      %v2499 = vunpack.c.l.b16 %v2284
      %v2500 = vunpack.c.h.b16 %v2284
      %v2501 = vunpack.c.l.b16 %v2285
      %v2502 = vunpack.c.l.b16 %v2286
      %v2503 = vunpack.c.h.b16 %v2286
      %v2504 = vunpack.c.l.b16 %v2287
      %v2505 = vunpack.c.h.b16 %v2287
      %v2506 = vunpack.c.l.b16 %v2288
      %v2507 = vunpack.c.h.b16 %v2288
      %v2508 = vunpack.c.l.b16 %v2289
      %v2509 = vunpack.c.h.b16 %v2289
      %v2510 = vunpack.c.l.b16 %v2290
      %v2511 = vunpack.c.l.b16 %v2291
      %v2512 = vunpack.c.h.b16 %v2291
      %v2513 = vunpack.c.l.b16 %v2292
      %v2514 = vunpack.c.h.b16 %v2292
      %v2515 = vunpack.c.l.b16 %v2293
      %v2516 = vunpack.c.h.b16 %v2293
      %v2517 = vunpack.c.l.b16 %v2294
      %v2518 = vunpack.c.h.b16 %v2294
      %v2519 = vunpack.c.l.b16 %v2295
      %v2520 = vunpack.c.l.b16 %v2296
      %v2521 = vunpack.c.h.b16 %v2296
      %v2522 = vunpack.c.l.b16 %v2297
      %v2523 = vunpack.c.h.b16 %v2297
      %v2524 = vunpack.c.l.b16 %v2298
      %v2525 = vunpack.c.h.b16 %v2298
      %v2526 = vunpack.c.l.b16 %v2299
      %v2527 = vunpack.c.h.b16 %v2299
      %v2528 = vunpack.c.l.b16 %v2300
      %v2529 = vunpack.c.l.b16 %v2301
      %v2530 = vunpack.c.h.b16 %v2301
      %v2531 = vunpack.c.l.b16 %v2302
      %v2532 = vunpack.c.h.b16 %v2302
      %v2533 = vunpack.c.l.b16 %v2303
      %v2534 = vunpack.c.h.b16 %v2303
      %v2535 = vunpack.c.l.b16 %v2304
      %v2536 = vunpack.c.h.b16 %v2304
      %v2537 = vunpack.c.l.b16 %v2305
      %v2538 = vunpack.c.l.b16 %v2306
      %v2539 = vunpack.c.h.b16 %v2306
      %v2540 = vunpack.c.l.b16 %v2307
      %v2541 = vunpack.c.h.b16 %v2307
      %v2542 = vunpack.c.l.b16 %v2308
      %v2543 = vunpack.c.h.b16 %v2308
      %v2544 = vunpack.c.l.b16 %v2309
      %v2545 = vunpack.c.h.b16 %v2309
      %v2546 = vunpack.c.l.b16 %v2310
      %v2547 = vunpack.c.l.b16 %v2311
      %v2548 = vunpack.c.h.b16 %v2311
      %v2549 = vunpack.c.l.b16 %v2312
      %v2550 = vunpack.c.h.b16 %v2312
      %v2551 = vunpack.c.l.b16 %v2313
      %v2552 = vunpack.c.h.b16 %v2313
      %v2553 = vunpack.c.l.b16 %v2314
      %v2554 = vunpack.c.h.b16 %v2314
      %v2555 = vunpack.c.l.b16 %v2315
      %v2556 = vunpack.c.l.b16 %v2316
      %v2557 = vunpack.c.h.b16 %v2316
      %v2558 = vunpack.c.l.b16 %v2317
      %v2559 = vunpack.c.h.b16 %v2317
      %v2560 = vunpack.c.l.b16 %v2318
      %v2561 = vunpack.c.h.b16 %v2318
      %v2562 = vunpack.c.l.b16 %v2319
      %v2563 = vunpack.c.h.b16 %v2319
      %v2564 = vunpack.c.l.b16 %v2320
      %v2565 = vunpack.c.l.b16 %v2321
      %v2566 = vunpack.c.h.b16 %v2321
      %v2567 = vunpack.c.l.b16 %v2322
      %v2568 = vunpack.c.h.b16 %v2322
      %v2569 = vunpack.c.l.b16 %v2323
      %v2570 = vunpack.c.h.b16 %v2323
      %v2571 = vunpack.c.l.b16 %v2324
      %v2572 = vunpack.c.h.b16 %v2324
      %v2573 = vunpack.c.l.b16 %v2325
      %v2574 = vunpack.c.l.b16 %v2326
      %v2575 = vunpack.c.h.b16 %v2326
      %v2576 = vunpack.c.l.b16 %v2327
      %v2577 = vunpack.c.h.b16 %v2327
      %v2578 = vunpack.c.l.b16 %v2328
      %v2579 = vunpack.c.h.b16 %v2328
      %v2580 = vunpack.c.l.b16 %v2329
      %v2581 = vunpack.c.h.b16 %v2329
      %v2582 = vunpack.c.l.b16 %v2330
      %v2583 = vunpack.c.l.b16 %v2331
      %v2584 = vunpack.c.h.b16 %v2331
      %v2585 = vunpack.c.l.b16 %v2332
      %v2586 = vunpack.c.h.b16 %v2332
      %v2587 = vunpack.c.l.b16 %v2333
      %v2588 = vunpack.c.h.b16 %v2333
      %v2589 = vunpack.c.l.b16 %v2334
      %v2590 = vunpack.c.h.b16 %v2334
      %v2591 = vunpack.c.l.b16 %v2335
      %v2592 = vunpack.c.l.b16 %v2336
      %v2593 = vunpack.c.h.b16 %v2336
      %v2594 = vunpack.c.l.b16 %v2337
      %v2595 = vunpack.c.h.b16 %v2337
      %v2596 = vunpack.c.l.b16 %v2338
      %v2597 = vunpack.c.h.b16 %v2338
      %v2598 = vunpack.c.l.b16 %v2339
      %v2599 = vunpack.c.h.b16 %v2339
      %v2600 = vunpack.c.l.b16 %v2340
      %v2601 = vunpack.c.l.b16 %v2341
      %v2602 = vunpack.c.h.b16 %v2341
      %v2603 = vunpack.c.l.b16 %v2342
      %v2604 = vunpack.c.h.b16 %v2342
      %v2605 = vunpack.c.l.b16 %v2343
      %v2606 = vunpack.c.h.b16 %v2343
      %v2607 = vunpack.c.l.b16 %v2344
      %v2608 = vunpack.c.h.b16 %v2344
      %v2609 = vunpack.c.l.b16 %v2345
      %v2610 = vunpack.c.l.b16 %v2346
      %v2611 = vunpack.c.h.b16 %v2346
      %v2612 = vunpack.c.l.b16 %v2347
      %v2613 = vunpack.c.h.b16 %v2347
      %v2614 = vunpack.c.l.b16 %v2348
      %v2615 = vunpack.c.h.b16 %v2348
      %v2616 = vunpack.c.l.b16 %v2349
      %v2617 = vunpack.c.h.b16 %v2349
      %v2618 = vunpack.c.l.b16 %v2350
      %v2619 = vunpack.c.l.b16 %v2351
      %v2620 = vunpack.c.h.b16 %v2351
      %v2621 = vunpack.c.l.b16 %v2352
      %v2622 = vunpack.c.h.b16 %v2352
      %v2623 = vunpack.c.l.b16 %v2353
      %v2624 = vunpack.c.h.b16 %v2353
      %v2625 = vunpack.c.l.b16 %v2354
      %v2626 = vunpack.c.h.b16 %v2354
      %v2627 = vunpack.c.l.b16 %v2355
      %v2628 = vunpack.c.l.b16 %v2356
      %v2629 = vunpack.c.h.b16 %v2356
      %v2630 = vunpack.c.l.b16 %v2357
      %v2631 = vunpack.c.h.b16 %v2357
      %v2632 = vunpack.c.l.b16 %v2358
      %v2633 = vunpack.c.h.b16 %v2358
      %v2634 = vunpack.c.l.b16 %v2359
      %v2635 = vunpack.c.h.b16 %v2359
      %v2636 = vunpack.c.l.b16 %v2360
      %v2637 = vunpack.c.l.b16 %v2361
      %v2638 = vunpack.c.h.b16 %v2361
      %v2639 = vunpack.c.l.b16 %v2362
      %v2640 = vunpack.c.h.b16 %v2362
      %v2641 = vunpack.c.l.b16 %v2363
      %v2642 = vunpack.c.h.b16 %v2363
      %v2643 = vunpack.c.l.b16 %v2364
      %v2644 = vunpack.c.h.b16 %v2364
      %v2645 = vunpack.c.l.b16 %v2365
      %v2646 = vpack.c.b16 %v2475, %v2466
      %v2647 = vpack.c.b16 %v2476, %v2467
      %v2648 = vpack.c.b16 %v2477, %v2468
      %v2649 = vpack.c.b16 %v2478, %v2469
      %v2650 = vpack.c.b16 %v2479, %v2470
      %v2651 = vpack.c.b16 %v2480, %v2471
      %v2652 = vpack.c.b16 %v2481, %v2472
      %v2653 = vpack.c.b16 %v2482, %v2473
      %v2654 = vpack.c.b16 %v2483, %v2474
      %v2655 = vpack.c.b16 %v2493, %v2484
      %v2656 = vpack.c.b16 %v2494, %v2485
      %v2657 = vpack.c.b16 %v2495, %v2486
      %v2658 = vpack.c.b16 %v2496, %v2487
      %v2659 = vpack.c.b16 %v2497, %v2488
      %v2660 = vpack.c.b16 %v2498, %v2489
      %v2661 = vpack.c.b16 %v2499, %v2490
      %v2662 = vpack.c.b16 %v2500, %v2491
      %v2663 = vpack.c.b16 %v2501, %v2492
      %v2664 = vpack.c.b16 %v2511, %v2502
      %v2665 = vpack.c.b16 %v2512, %v2503
      %v2666 = vpack.c.b16 %v2513, %v2504
      %v2667 = vpack.c.b16 %v2514, %v2505
      %v2668 = vpack.c.b16 %v2515, %v2506
      %v2669 = vpack.c.b16 %v2516, %v2507
      %v2670 = vpack.c.b16 %v2517, %v2508
      %v2671 = vpack.c.b16 %v2518, %v2509
      %v2672 = vpack.c.b16 %v2519, %v2510
      %v2673 = vpack.c.b16 %v2529, %v2520
      %v2674 = vpack.c.b16 %v2530, %v2521
      %v2675 = vpack.c.b16 %v2531, %v2522
      %v2676 = vpack.c.b16 %v2532, %v2523
      %v2677 = vpack.c.b16 %v2533, %v2524
      %v2678 = vpack.c.b16 %v2534, %v2525
      %v2679 = vpack.c.b16 %v2535, %v2526
      %v2680 = vpack.c.b16 %v2536, %v2527
      %v2681 = vpack.c.b16 %v2537, %v2528
      %v2682 = vpack.c.b16 %v2547, %v2538
      %v2683 = vpack.c.b16 %v2548, %v2539
      %v2684 = vpack.c.b16 %v2549, %v2540
      %v2685 = vpack.c.b16 %v2550, %v2541
      %v2686 = vpack.c.b16 %v2551, %v2542
      %v2687 = vpack.c.b16 %v2552, %v2543
      %v2688 = vpack.c.b16 %v2553, %v2544
      %v2689 = vpack.c.b16 %v2554, %v2545
      %v2690 = vpack.c.b16 %v2555, %v2546
      %v2691 = vpack.c.b16 %v2565, %v2556
      %v2692 = vpack.c.b16 %v2566, %v2557
      %v2693 = vpack.c.b16 %v2567, %v2558
      %v2694 = vpack.c.b16 %v2568, %v2559
      %v2695 = vpack.c.b16 %v2569, %v2560
      %v2696 = vpack.c.b16 %v2570, %v2561
      %v2697 = vpack.c.b16 %v2571, %v2562
      %v2698 = vpack.c.b16 %v2572, %v2563
      %v2699 = vpack.c.b16 %v2573, %v2564
      %v2700 = vpack.c.b16 %v2583, %v2574
      %v2701 = vpack.c.b16 %v2584, %v2575
      %v2702 = vpack.c.b16 %v2585, %v2576
      %v2703 = vpack.c.b16 %v2586, %v2577
      %v2704 = vpack.c.b16 %v2587, %v2578
      %v2705 = vpack.c.b16 %v2588, %v2579
      %v2706 = vpack.c.b16 %v2589, %v2580
      %v2707 = vpack.c.b16 %v2590, %v2581
      %v2708 = vpack.c.b16 %v2591, %v2582
      %v2709 = vpack.c.b16 %v2601, %v2592
      %v2710 = vpack.c.b16 %v2602, %v2593
      %v2711 = vpack.c.b16 %v2603, %v2594
      %v2712 = vpack.c.b16 %v2604, %v2595
      %v2713 = vpack.c.b16 %v2605, %v2596
      %v2714 = vpack.c.b16 %v2606, %v2597
      %v2715 = vpack.c.b16 %v2607, %v2598
      %v2716 = vpack.c.b16 %v2608, %v2599
      %v2717 = vpack.c.b16 %v2609, %v2600
      %v2718 = vpack.c.b16 %v2619, %v2610
      %v2719 = vpack.c.b16 %v2620, %v2611
      %v2720 = vpack.c.b16 %v2621, %v2612
      %v2721 = vpack.c.b16 %v2622, %v2613
      %v2722 = vpack.c.b16 %v2623, %v2614
      %v2723 = vpack.c.b16 %v2624, %v2615
      %v2724 = vpack.c.b16 %v2625, %v2616
      %v2725 = vpack.c.b16 %v2626, %v2617
      %v2726 = vpack.c.b16 %v2627, %v2618
      %v2727 = vpack.c.b16 %v2637, %v2628
      %v2728 = vpack.c.b16 %v2638, %v2629
      %v2729 = vpack.c.b16 %v2639, %v2630
      %v2730 = vpack.c.b16 %v2640, %v2631
      %v2731 = vpack.c.b16 %v2641, %v2632
      %v2732 = vpack.c.b16 %v2642, %v2633
      %v2733 = vpack.c.b16 %v2643, %v2634
      %v2734 = vpack.c.b16 %v2644, %v2635
      %v2735 = vpack.c.b16 %v2645, %v2636
      %2826 = vmatprep.subr.bf16.mxu0 0
      %2827 = vmatpush1.bf16.msra.mxu0 %v2194
      %2828 = vmatprep.subr.bf16.mxu0 0
      %2829 = vmatpush1.bf16.msra.mxu0 %v2195
      %2830 = vmatprep.subr.bf16.mxu0 0
      %2831 = vmatpush1.bf16.msra.mxu0 %v2196
      %2832 = vmatprep.subr.bf16.mxu0 0
      %2833 = vmatpush1.bf16.msra.mxu0 %v2197
      %2834 = vmatprep.subr.bf16.mxu0 0
      %2835 = vmatpush1.bf16.msra.mxu0 %v2198
      %2836 = vmatprep.subr.bf16.mxu0 0
      %2837 = vmatpush1.bf16.msra.mxu0 %v2199
      %2838 = vmatprep.subr.bf16.mxu0 0
      %2839 = vmatpush1.bf16.msra.mxu0 %v2200
      %2840 = vmatprep.subr.bf16.mxu0 0
      %2841 = vmatpush1.bf16.msra.mxu0 %v2201
      %2842 = vmatprep.subr.bf16.mxu0 0
      %2843 = vmatpush1.bf16.msra.mxu0 %v2202
      %2844 = vmatprep.subr.bf16.mxu0 0
      %2845 = vmatpush1.bf16.msra.mxu0 %v2203
      %2846 = vmatprep.subr.bf16.mxu0 0
      %2847 = vmatpush1.bf16.msra.mxu0 %v2204
      %2848 = vmatprep.subr.bf16.mxu0 0
      %2849 = vmatpush1.bf16.msra.mxu0 %v2205
      %2850 = vmatprep.subr.bf16.mxu0 0
      %2851 = vmatpush1.bf16.msra.mxu0 %v2206
      %2852 = vmatprep.subr.bf16.mxu0 0
      %2853 = vmatpush1.bf16.msra.mxu0 %v2207
      %2854 = vmatprep.subr.bf16.mxu0 0
      %2855 = vmatpush1.bf16.msra.mxu0 %v2208
      %2856 = vmatprep.subr.bf16.mxu0 0
      %2857 = vmatpush1.bf16.msra.mxu0 %v2209
      %2858 = vmatprep.mubr.bf16.mxu0 %v2647
      %2859 = vmatmul.mubr.bf16.gmra.mrb[0].mxu0 %v2646
      %v2860 = vpop.f32.mrb[0].mxu0
      %v2861 = vadd.f32 0.0, %v2860
      %v2862 = vpop.f32.mrb[0].mxu0
      %v2863 = vpop.f32.mrb[0].mxu0
      %v2864 = vadd.f32 0.0, %v2863
      %v2865 = vpop.f32.mrb[0].mxu0
      %2866 = vmatprep.mubr.bf16.mxu0 %v2656
      %2867 = vmatmul.mubr.bf16.gmra.mrb[0].mxu0 %v2655
      %v2868 = vpop.f32.mrb[0].mxu0
      %v2869 = vadd.f32 0.0, %v2868
      %v2870 = vpop.f32.mrb[0].mxu0
      %v2871 = vpop.f32.mrb[0].mxu0
      %v2872 = vadd.f32 0.0, %v2871
      %v2873 = vpop.f32.mrb[0].mxu0
      %2874 = vmatprep.mubr.bf16.mxu0 %v2665
      %2875 = vmatmul.mubr.bf16.gmra.mrb[0].mxu0 %v2664
      %v2876 = vpop.f32.mrb[0].mxu0
      %v2877 = vadd.f32 0.0, %v2876
      %v2878 = vpop.f32.mrb[0].mxu0
      %v2879 = vpop.f32.mrb[0].mxu0
      %v2880 = vadd.f32 0.0, %v2879
      %v2881 = vpop.f32.mrb[0].mxu0
      %2882 = vmatprep.mubr.bf16.mxu0 %v2674
      %2883 = vmatmul.mubr.bf16.gmra.mrb[0].mxu0 %v2673
      %v2884 = vpop.f32.mrb[0].mxu0
      %v2885 = vadd.f32 0.0, %v2884
      %v2886 = vpop.f32.mrb[0].mxu0
      %v2887 = vpop.f32.mrb[0].mxu0
      %v2888 = vadd.f32 0.0, %v2887
      %v2889 = vpop.f32.mrb[0].mxu0
      %2890 = vmatprep.mubr.bf16.mxu0 %v2683
      %2891 = vmatmul.mubr.bf16.gmra.mrb[0].mxu0 %v2682
      %v2892 = vpop.f32.mrb[0].mxu0
      %v2893 = vadd.f32 0.0, %v2892
      %v2894 = vpop.f32.mrb[0].mxu0
      %v2895 = vpop.f32.mrb[0].mxu0
      %v2896 = vadd.f32 0.0, %v2895
      %v2897 = vpop.f32.mrb[0].mxu0
      %2898 = vmatprep.mubr.bf16.mxu0 %v2692
      %2899 = vmatmul.mubr.bf16.gmra.mrb[0].mxu0 %v2691
      %v2900 = vpop.f32.mrb[0].mxu0
      %v2901 = vadd.f32 0.0, %v2900
      %v2902 = vpop.f32.mrb[0].mxu0
      %v2903 = vpop.f32.mrb[0].mxu0
      %v2904 = vadd.f32 0.0, %v2903
      %v2905 = vpop.f32.mrb[0].mxu0
      %2906 = vmatprep.mubr.bf16.mxu0 %v2701
      %2907 = vmatmul.mubr.bf16.gmra.mrb[0].mxu0 %v2700
      %v2908 = vpop.f32.mrb[0].mxu0
      %v2909 = vadd.f32 0.0, %v2908
      %v2910 = vpop.f32.mrb[0].mxu0
      %v2911 = vpop.f32.mrb[0].mxu0
      %v2912 = vadd.f32 0.0, %v2911
      %v2913 = vpop.f32.mrb[0].mxu0
      %2914 = vmatprep.mubr.bf16.mxu0 %v2710
      %2915 = vmatmul.mubr.bf16.gmra.mrb[0].mxu0 %v2709
      %v2916 = vpop.f32.mrb[0].mxu0
      %v2917 = vadd.f32 0.0, %v2916
      %v2918 = vpop.f32.mrb[0].mxu0
      %v2919 = vpop.f32.mrb[0].mxu0
      %v2920 = vadd.f32 0.0, %v2919
      %v2921 = vpop.f32.mrb[0].mxu0
      %2922 = vmatprep.mubr.bf16.mxu0 %v2719
      %2923 = vmatmul.mubr.bf16.gmra.mrb[0].mxu0 %v2718
      %v2924 = vpop.f32.mrb[0].mxu0
      %v2925 = vadd.f32 0.0, %v2924
      %v2926 = vpop.f32.mrb[0].mxu0
      %v2927 = vpop.f32.mrb[0].mxu0
      %v2928 = vadd.f32 0.0, %v2927
      %v2929 = vpop.f32.mrb[0].mxu0
      %2930 = vmatprep.mubr.bf16.mxu0 %v2728
      %2931 = vmatmul.mubr.bf16.gmra.mrb[0].mxu0 %v2727
      %v2932 = vpop.f32.mrb[0].mxu0
      %v2933 = vadd.f32 0.0, %v2932
      %v2934 = vpop.f32.mrb[0].mxu0
      %v2935 = vpop.f32.mrb[0].mxu0
      %v2936 = vadd.f32 0.0, %v2935
      %v2937 = vpop.f32.mrb[0].mxu0
      %2938 = vdwg.mxu0
      %2939 = vmatprep.subr.bf16.mxu0 0
      %2940 = vmatpush1.bf16.msra.mxu0 %v2210
      %2941 = vmatprep.subr.bf16.mxu0 0
      %2942 = vmatpush1.bf16.msra.mxu0 %v2211
      %2943 = vmatprep.subr.bf16.mxu0 0
      %2944 = vmatpush1.bf16.msra.mxu0 %v2212
      %2945 = vmatprep.subr.bf16.mxu0 0
      %2946 = vmatpush1.bf16.msra.mxu0 %v2213
      %2947 = vmatprep.subr.bf16.mxu0 0
      %2948 = vmatpush1.bf16.msra.mxu0 %v2214
      %2949 = vmatprep.subr.bf16.mxu0 0
      %2950 = vmatpush1.bf16.msra.mxu0 %v2215
      %2951 = vmatprep.subr.bf16.mxu0 0
      %2952 = vmatpush1.bf16.msra.mxu0 %v2216
      %2953 = vmatprep.subr.bf16.mxu0 0
      %2954 = vmatpush1.bf16.msra.mxu0 %v2217
      %2955 = vmatprep.subr.bf16.mxu0 0
      %2956 = vmatpush1.bf16.msra.mxu0 %v2218
      %2957 = vmatprep.subr.bf16.mxu0 0
      %2958 = vmatpush1.bf16.msra.mxu0 %v2219
      %2959 = vmatprep.subr.bf16.mxu0 0
      %2960 = vmatpush1.bf16.msra.mxu0 %v2220
      %2961 = vmatprep.subr.bf16.mxu0 0
      %2962 = vmatpush1.bf16.msra.mxu0 %v2221
      %2963 = vmatprep.subr.bf16.mxu0 0
      %2964 = vmatpush1.bf16.msra.mxu0 %v2222
      %2965 = vmatprep.subr.bf16.mxu0 0
      %2966 = vmatpush1.bf16.msra.mxu0 %v2223
      %2967 = vmatprep.subr.bf16.mxu0 0
      %2968 = vmatpush1.bf16.msra.mxu0 %v2224
      %2969 = vmatprep.subr.bf16.mxu0 0
      %2970 = vmatpush1.bf16.msra.mxu0 %v2225
      %2971 = vmatprep.mubr.bf16.mxu0 %v2649
      %2972 = vmatmul.mubr.bf16.gmra.mrb[0].mxu0 %v2648
      %v2973 = vpop.f32.mrb[0].mxu0
      %v2974 = vadd.f32 %v2861, %v2973
      %v2975 = vpop.f32.mrb[0].mxu0
      %v2976 = vpop.f32.mrb[0].mxu0
      %v2977 = vadd.f32 %v2864, %v2976
      %v2978 = vpop.f32.mrb[0].mxu0
      %2979 = vmatprep.mubr.bf16.mxu0 %v2658
      %2980 = vmatmul.mubr.bf16.gmra.mrb[0].mxu0 %v2657
      %v2981 = vpop.f32.mrb[0].mxu0
      %v2982 = vadd.f32 %v2869, %v2981
      %v2983 = vpop.f32.mrb[0].mxu0
      %v2984 = vpop.f32.mrb[0].mxu0
      %v2985 = vadd.f32 %v2872, %v2984
      %v2986 = vpop.f32.mrb[0].mxu0
      %2987 = vmatprep.mubr.bf16.mxu0 %v2667
      %2988 = vmatmul.mubr.bf16.gmra.mrb[0].mxu0 %v2666
      %v2989 = vpop.f32.mrb[0].mxu0
      %v2990 = vadd.f32 %v2877, %v2989
      %v2991 = vpop.f32.mrb[0].mxu0
      %v2992 = vpop.f32.mrb[0].mxu0
      %v2993 = vadd.f32 %v2880, %v2992
      %v2994 = vpop.f32.mrb[0].mxu0
      %2995 = vmatprep.mubr.bf16.mxu0 %v2676
      %2996 = vmatmul.mubr.bf16.gmra.mrb[0].mxu0 %v2675
      %v2997 = vpop.f32.mrb[0].mxu0
      %v2998 = vadd.f32 %v2885, %v2997
      %v2999 = vpop.f32.mrb[0].mxu0
      %v3000 = vpop.f32.mrb[0].mxu0
      %v3001 = vadd.f32 %v2888, %v3000
      %v3002 = vpop.f32.mrb[0].mxu0
      %3003 = vmatprep.mubr.bf16.mxu0 %v2685
      %3004 = vmatmul.mubr.bf16.gmra.mrb[0].mxu0 %v2684
      %v3005 = vpop.f32.mrb[0].mxu0
      %v3006 = vadd.f32 %v2893, %v3005
      %v3007 = vpop.f32.mrb[0].mxu0
      %v3008 = vpop.f32.mrb[0].mxu0
      %v3009 = vadd.f32 %v2896, %v3008
      %v3010 = vpop.f32.mrb[0].mxu0
      %3011 = vmatprep.mubr.bf16.mxu0 %v2694
      %3012 = vmatmul.mubr.bf16.gmra.mrb[0].mxu0 %v2693
      %v3013 = vpop.f32.mrb[0].mxu0
      %v3014 = vadd.f32 %v2901, %v3013
      %v3015 = vpop.f32.mrb[0].mxu0
      %v3016 = vpop.f32.mrb[0].mxu0
      %v3017 = vadd.f32 %v2904, %v3016
      %v3018 = vpop.f32.mrb[0].mxu0
      %3019 = vmatprep.mubr.bf16.mxu0 %v2703
      %3020 = vmatmul.mubr.bf16.gmra.mrb[0].mxu0 %v2702
      %v3021 = vpop.f32.mrb[0].mxu0
      %v3022 = vadd.f32 %v2909, %v3021
      %v3023 = vpop.f32.mrb[0].mxu0
      %v3024 = vpop.f32.mrb[0].mxu0
      %v3025 = vadd.f32 %v2912, %v3024
      %v3026 = vpop.f32.mrb[0].mxu0
      %3027 = vmatprep.mubr.bf16.mxu0 %v2712
      %3028 = vmatmul.mubr.bf16.gmra.mrb[0].mxu0 %v2711
      %v3029 = vpop.f32.mrb[0].mxu0
      %v3030 = vadd.f32 %v2917, %v3029
      %v3031 = vpop.f32.mrb[0].mxu0
      %v3032 = vpop.f32.mrb[0].mxu0
      %v3033 = vadd.f32 %v2920, %v3032
      %v3034 = vpop.f32.mrb[0].mxu0
      %3035 = vmatprep.mubr.bf16.mxu0 %v2721
      %3036 = vmatmul.mubr.bf16.gmra.mrb[0].mxu0 %v2720
      %v3037 = vpop.f32.mrb[0].mxu0
      %v3038 = vadd.f32 %v2925, %v3037
      %v3039 = vpop.f32.mrb[0].mxu0
      %v3040 = vpop.f32.mrb[0].mxu0
      %v3041 = vadd.f32 %v2928, %v3040
      %v3042 = vpop.f32.mrb[0].mxu0
      %3043 = vmatprep.mubr.bf16.mxu0 %v2730
      %3044 = vmatmul.mubr.bf16.gmra.mrb[0].mxu0 %v2729
      %v3045 = vpop.f32.mrb[0].mxu0
      %v3046 = vadd.f32 %v2933, %v3045
      %v3047 = vpop.f32.mrb[0].mxu0
      %v3048 = vpop.f32.mrb[0].mxu0
      %v3049 = vadd.f32 %v2936, %v3048
      %v3050 = vpop.f32.mrb[0].mxu0
      %3051 = vdwg.mxu0
      %3052 = vmatprep.subr.bf16.mxu0 0
      %3053 = vmatpush1.bf16.msra.mxu0 %v2226
      %3054 = vmatprep.subr.bf16.mxu0 0
      %3055 = vmatpush1.bf16.msra.mxu0 %v2227
      %3056 = vmatprep.subr.bf16.mxu0 0
      %3057 = vmatpush1.bf16.msra.mxu0 %v2228
      %3058 = vmatprep.subr.bf16.mxu0 0
      %3059 = vmatpush1.bf16.msra.mxu0 %v2229
      %3060 = vmatprep.subr.bf16.mxu0 0
      %3061 = vmatpush1.bf16.msra.mxu0 %v2230
      %3062 = vmatprep.subr.bf16.mxu0 0
      %3063 = vmatpush1.bf16.msra.mxu0 %v2231
      %3064 = vmatprep.subr.bf16.mxu0 0
      %3065 = vmatpush1.bf16.msra.mxu0 %v2232
      %3066 = vmatprep.subr.bf16.mxu0 0
      %3067 = vmatpush1.bf16.msra.mxu0 %v2233
      %3068 = vmatprep.subr.bf16.mxu0 0
      %3069 = vmatpush1.bf16.msra.mxu0 %v2234
      %3070 = vmatprep.subr.bf16.mxu0 0
      %3071 = vmatpush1.bf16.msra.mxu0 %v2235
      %3072 = vmatprep.subr.bf16.mxu0 0
      %3073 = vmatpush1.bf16.msra.mxu0 %v2236
      %3074 = vmatprep.subr.bf16.mxu0 0
      %3075 = vmatpush1.bf16.msra.mxu0 %v2237
      %3076 = vmatprep.subr.bf16.mxu0 0
      %3077 = vmatpush1.bf16.msra.mxu0 %v2238
      %3078 = vmatprep.subr.bf16.mxu0 0
      %3079 = vmatpush1.bf16.msra.mxu0 %v2239
      %3080 = vmatprep.subr.bf16.mxu0 0
      %3081 = vmatpush1.bf16.msra.mxu0 %v2240
      %3082 = vmatprep.subr.bf16.mxu0 0
      %3083 = vmatpush1.bf16.msra.mxu0 %v2241
      %3084 = vmatprep.mubr.bf16.mxu0 %v2651
      %3085 = vmatmul.mubr.bf16.gmra.mrb[0].mxu0 %v2650
      %v3086 = vpop.f32.mrb[0].mxu0
      %v3087 = vadd.f32 %v2974, %v3086
      %v3088 = vpop.f32.mrb[0].mxu0
      %v3089 = vpop.f32.mrb[0].mxu0
      %v3090 = vadd.f32 %v2977, %v3089
      %v3091 = vpop.f32.mrb[0].mxu0
      %3092 = vmatprep.mubr.bf16.mxu0 %v2660
      %3093 = vmatmul.mubr.bf16.gmra.mrb[0].mxu0 %v2659
      %v3094 = vpop.f32.mrb[0].mxu0
      %v3095 = vadd.f32 %v2982, %v3094
      %v3096 = vpop.f32.mrb[0].mxu0
      %v3097 = vpop.f32.mrb[0].mxu0
      %v3098 = vadd.f32 %v2985, %v3097
      %v3099 = vpop.f32.mrb[0].mxu0
      %3100 = vmatprep.mubr.bf16.mxu0 %v2669
      %3101 = vmatmul.mubr.bf16.gmra.mrb[0].mxu0 %v2668
      %v3102 = vpop.f32.mrb[0].mxu0
      %v3103 = vadd.f32 %v2990, %v3102
      %v3104 = vpop.f32.mrb[0].mxu0
      %v3105 = vpop.f32.mrb[0].mxu0
      %v3106 = vadd.f32 %v2993, %v3105
      %v3107 = vpop.f32.mrb[0].mxu0
      %3108 = vmatprep.mubr.bf16.mxu0 %v2678
      %3109 = vmatmul.mubr.bf16.gmra.mrb[0].mxu0 %v2677
      %v3110 = vpop.f32.mrb[0].mxu0
      %v3111 = vadd.f32 %v2998, %v3110
      %v3112 = vpop.f32.mrb[0].mxu0
      %v3113 = vpop.f32.mrb[0].mxu0
      %v3114 = vadd.f32 %v3001, %v3113
      %v3115 = vpop.f32.mrb[0].mxu0
      %3116 = vmatprep.mubr.bf16.mxu0 %v2687
      %3117 = vmatmul.mubr.bf16.gmra.mrb[0].mxu0 %v2686
      %v3118 = vpop.f32.mrb[0].mxu0
      %v3119 = vadd.f32 %v3006, %v3118
      %v3120 = vpop.f32.mrb[0].mxu0
      %v3121 = vpop.f32.mrb[0].mxu0
      %v3122 = vadd.f32 %v3009, %v3121
      %v3123 = vpop.f32.mrb[0].mxu0
      %3124 = vmatprep.mubr.bf16.mxu0 %v2696
      %3125 = vmatmul.mubr.bf16.gmra.mrb[0].mxu0 %v2695
      %v3126 = vpop.f32.mrb[0].mxu0
      %v3127 = vadd.f32 %v3014, %v3126
      %v3128 = vpop.f32.mrb[0].mxu0
      %v3129 = vpop.f32.mrb[0].mxu0
      %v3130 = vadd.f32 %v3017, %v3129
      %v3131 = vpop.f32.mrb[0].mxu0
      %3132 = vmatprep.mubr.bf16.mxu0 %v2705
      %3133 = vmatmul.mubr.bf16.gmra.mrb[0].mxu0 %v2704
      %v3134 = vpop.f32.mrb[0].mxu0
      %v3135 = vadd.f32 %v3022, %v3134
      %v3136 = vpop.f32.mrb[0].mxu0
      %v3137 = vpop.f32.mrb[0].mxu0
      %v3138 = vadd.f32 %v3025, %v3137
      %v3139 = vpop.f32.mrb[0].mxu0
      %3140 = vmatprep.mubr.bf16.mxu0 %v2714
      %3141 = vmatmul.mubr.bf16.gmra.mrb[0].mxu0 %v2713
      %v3142 = vpop.f32.mrb[0].mxu0
      %v3143 = vadd.f32 %v3030, %v3142
      %v3144 = vpop.f32.mrb[0].mxu0
      %v3145 = vpop.f32.mrb[0].mxu0
      %v3146 = vadd.f32 %v3033, %v3145
      %v3147 = vpop.f32.mrb[0].mxu0
      %3148 = vmatprep.mubr.bf16.mxu0 %v2723
      %3149 = vmatmul.mubr.bf16.gmra.mrb[0].mxu0 %v2722
      %v3150 = vpop.f32.mrb[0].mxu0
      %v3151 = vadd.f32 %v3038, %v3150
      %v3152 = vpop.f32.mrb[0].mxu0
      %v3153 = vpop.f32.mrb[0].mxu0
      %v3154 = vadd.f32 %v3041, %v3153
      %v3155 = vpop.f32.mrb[0].mxu0
      %3156 = vmatprep.mubr.bf16.mxu0 %v2732
      %3157 = vmatmul.mubr.bf16.gmra.mrb[0].mxu0 %v2731
      %v3158 = vpop.f32.mrb[0].mxu0
      %v3159 = vadd.f32 %v3046, %v3158
      %v3160 = vpop.f32.mrb[0].mxu0
      %v3161 = vpop.f32.mrb[0].mxu0
      %v3162 = vadd.f32 %v3049, %v3161
      %v3163 = vpop.f32.mrb[0].mxu0
      %3164 = vdwg.mxu0
      %3165 = vmatprep.subr.bf16.mxu0 0
      %3166 = vmatpush1.bf16.msra.mxu0 %v2242
      %3167 = vmatprep.subr.bf16.mxu0 0
      %3168 = vmatpush1.bf16.msra.mxu0 %v2243
      %3169 = vmatprep.subr.bf16.mxu0 0
      %3170 = vmatpush1.bf16.msra.mxu0 %v2244
      %3171 = vmatprep.subr.bf16.mxu0 0
      %3172 = vmatpush1.bf16.msra.mxu0 %v2245
      %3173 = vmatprep.subr.bf16.mxu0 0
      %3174 = vmatpush1.bf16.msra.mxu0 %v2246
      %3175 = vmatprep.subr.bf16.mxu0 0
      %3176 = vmatpush1.bf16.msra.mxu0 %v2247
      %3177 = vmatprep.subr.bf16.mxu0 0
      %3178 = vmatpush1.bf16.msra.mxu0 %v2248
      %3179 = vmatprep.subr.bf16.mxu0 0
      %3180 = vmatpush1.bf16.msra.mxu0 %v2249
      %3181 = vmatprep.subr.bf16.mxu0 0
      %3182 = vmatpush1.bf16.msra.mxu0 %v2250
      %3183 = vmatprep.subr.bf16.mxu0 0
      %3184 = vmatpush1.bf16.msra.mxu0 %v2251
      %3185 = vmatprep.subr.bf16.mxu0 0
      %3186 = vmatpush1.bf16.msra.mxu0 %v2252
      %3187 = vmatprep.subr.bf16.mxu0 0
      %3188 = vmatpush1.bf16.msra.mxu0 %v2253
      %3189 = vmatprep.subr.bf16.mxu0 0
      %3190 = vmatpush1.bf16.msra.mxu0 %v2254
      %3191 = vmatprep.subr.bf16.mxu0 0
      %3192 = vmatpush1.bf16.msra.mxu0 %v2255
      %3193 = vmatprep.subr.bf16.mxu0 0
      %3194 = vmatpush1.bf16.msra.mxu0 %v2256
      %3195 = vmatprep.subr.bf16.mxu0 0
      %3196 = vmatpush1.bf16.msra.mxu0 %v2257
      %3197 = vmatprep.mubr.bf16.mxu0 %v2653
      %3198 = vmatmul.mubr.bf16.gmra.mrb[0].mxu0 %v2652
      %v3199 = vpop.f32.mrb[0].mxu0
      %v3200 = vadd.f32 %v3087, %v3199
      %v3201 = vpop.f32.mrb[0].mxu0
      %v3202 = vpop.f32.mrb[0].mxu0
      %v3203 = vadd.f32 %v3090, %v3202
      %v3204 = vpop.f32.mrb[0].mxu0
      %3205 = vmatprep.mubr.bf16.mxu0 %v2662
      %3206 = vmatmul.mubr.bf16.gmra.mrb[0].mxu0 %v2661
      %v3207 = vpop.f32.mrb[0].mxu0
      %v3208 = vadd.f32 %v3095, %v3207
      %v3209 = vpop.f32.mrb[0].mxu0
      %v3210 = vpop.f32.mrb[0].mxu0
      %v3211 = vadd.f32 %v3098, %v3210
      %v3212 = vpop.f32.mrb[0].mxu0
      %3213 = vmatprep.mubr.bf16.mxu0 %v2671
      %3214 = vmatmul.mubr.bf16.gmra.mrb[0].mxu0 %v2670
      %v3215 = vpop.f32.mrb[0].mxu0
      %v3216 = vadd.f32 %v3103, %v3215
      %v3217 = vpop.f32.mrb[0].mxu0
      %v3218 = vpop.f32.mrb[0].mxu0
      %v3219 = vadd.f32 %v3106, %v3218
      %v3220 = vpop.f32.mrb[0].mxu0
      %3221 = vmatprep.mubr.bf16.mxu0 %v2680
      %3222 = vmatmul.mubr.bf16.gmra.mrb[0].mxu0 %v2679
      %v3223 = vpop.f32.mrb[0].mxu0
      %v3224 = vadd.f32 %v3111, %v3223
      %v3225 = vpop.f32.mrb[0].mxu0
      %v3226 = vpop.f32.mrb[0].mxu0
      %v3227 = vadd.f32 %v3114, %v3226
      %v3228 = vpop.f32.mrb[0].mxu0
      %3229 = vmatprep.mubr.bf16.mxu0 %v2689
      %3230 = vmatmul.mubr.bf16.gmra.mrb[0].mxu0 %v2688
      %v3231 = vpop.f32.mrb[0].mxu0
      %v3232 = vadd.f32 %v3119, %v3231
      %v3233 = vpop.f32.mrb[0].mxu0
      %v3234 = vpop.f32.mrb[0].mxu0
      %v3235 = vadd.f32 %v3122, %v3234
      %v3236 = vpop.f32.mrb[0].mxu0
      %3237 = vmatprep.mubr.bf16.mxu0 %v2698
      %3238 = vmatmul.mubr.bf16.gmra.mrb[0].mxu0 %v2697
      %v3239 = vpop.f32.mrb[0].mxu0
      %v3240 = vadd.f32 %v3127, %v3239
      %v3241 = vpop.f32.mrb[0].mxu0
      %v3242 = vpop.f32.mrb[0].mxu0
      %v3243 = vadd.f32 %v3130, %v3242
      %v3244 = vpop.f32.mrb[0].mxu0
      %3245 = vmatprep.mubr.bf16.mxu0 %v2707
      %3246 = vmatmul.mubr.bf16.gmra.mrb[0].mxu0 %v2706
      %v3247 = vpop.f32.mrb[0].mxu0
      %v3248 = vadd.f32 %v3135, %v3247
      %v3249 = vpop.f32.mrb[0].mxu0
      %v3250 = vpop.f32.mrb[0].mxu0
      %v3251 = vadd.f32 %v3138, %v3250
      %v3252 = vpop.f32.mrb[0].mxu0
      %3253 = vmatprep.mubr.bf16.mxu0 %v2716
      %3254 = vmatmul.mubr.bf16.gmra.mrb[0].mxu0 %v2715
      %v3255 = vpop.f32.mrb[0].mxu0
      %v3256 = vadd.f32 %v3143, %v3255
      %v3257 = vpop.f32.mrb[0].mxu0
      %v3258 = vpop.f32.mrb[0].mxu0
      %v3259 = vadd.f32 %v3146, %v3258
      %v3260 = vpop.f32.mrb[0].mxu0
      %3261 = vmatprep.mubr.bf16.mxu0 %v2725
      %3262 = vmatmul.mubr.bf16.gmra.mrb[0].mxu0 %v2724
      %v3263 = vpop.f32.mrb[0].mxu0
      %v3264 = vadd.f32 %v3151, %v3263
      %v3265 = vpop.f32.mrb[0].mxu0
      %v3266 = vpop.f32.mrb[0].mxu0
      %v3267 = vadd.f32 %v3154, %v3266
      %v3268 = vpop.f32.mrb[0].mxu0
      %3269 = vmatprep.mubr.bf16.mxu0 %v2734
      %3270 = vmatmul.mubr.bf16.gmra.mrb[0].mxu0 %v2733
      %v3271 = vpop.f32.mrb[0].mxu0
      %v3272 = vadd.f32 %v3159, %v3271
      %v3273 = vpop.f32.mrb[0].mxu0
      %v3274 = vpop.f32.mrb[0].mxu0
      %v3275 = vadd.f32 %v3162, %v3274
      %v3276 = vpop.f32.mrb[0].mxu0
      %3277 = vdwg.mxu0
      %3278 = vmatprep.subr.bf16.mxu0 0
      %3279 = vmatpush1.bf16.msra.mxu0 %v2258
      %3280 = vmatprep.subr.bf16.mxu0 0
      %3281 = vmatpush1.bf16.msra.mxu0 %v2259
      %3282 = vmatprep.subr.bf16.mxu0 0
      %3283 = vmatpush1.bf16.msra.mxu0 %v2260
      %3284 = vmatprep.subr.bf16.mxu0 0
      %3285 = vmatpush1.bf16.msra.mxu0 %v2261
      %3286 = vmatprep.subr.bf16.mxu0 0
      %3287 = vmatpush1.bf16.msra.mxu0 %v2262
      %3288 = vmatprep.subr.bf16.mxu0 0
      %3289 = vmatpush1.bf16.msra.mxu0 %v2263
      %3290 = vmatprep.subr.bf16.mxu0 0
      %3291 = vmatpush1.bf16.msra.mxu0 %v2264
      %3292 = vmatprep.subr.bf16.mxu0 0
      %3293 = vmatpush1.bf16.msra.mxu0 %v2265
      %3294 = vmatprep.subr.bf16.mxu0 0
      %3295 = vmatpush1.bf16.msra.mxu0 0
      %3296 = vmatprep.subr.bf16.mxu0 0
      %3297 = vmatpush1.bf16.msra.mxu0 0
      %3298 = vmatprep.subr.bf16.mxu0 0
      %3299 = vmatpush1.bf16.msra.mxu0 0
      %3300 = vmatprep.subr.bf16.mxu0 0
      %3301 = vmatpush1.bf16.msra.mxu0 0
      %3302 = vmatprep.subr.bf16.mxu0 0
      %3303 = vmatpush1.bf16.msra.mxu0 0
      %3304 = vmatprep.subr.bf16.mxu0 0
      %3305 = vmatpush1.bf16.msra.mxu0 0
      %3306 = vmatprep.subr.bf16.mxu0 0
      %3307 = vmatpush1.bf16.msra.mxu0 0
      %3308 = vmatprep.subr.bf16.mxu0 0
      %3309 = vmatpush1.bf16.msra.mxu0 0
      %3310 = vmatprep.mubr.bf16.mxu0 0
      %3311 = vmatmul.mubr.bf16.gmra.mrb[0].mxu0 %v2654
      %v3312 = vpop.f32.mrb[0].mxu0
      %v3313 = vadd.f32 %v3200, %v3312
      %v3314 = vpop.f32.mrb[0].mxu0
      %v3315 = vpop.f32.mrb[0].mxu0
      %v3316 = vadd.f32 %v3203, %v3315
      %v3317 = vpop.f32.mrb[0].mxu0
      %3318 = vmatprep.mubr.bf16.mxu0 0
      %3319 = vmatmul.mubr.bf16.gmra.mrb[0].mxu0 %v2663
      %v3320 = vpop.f32.mrb[0].mxu0
      %v3321 = vadd.f32 %v3208, %v3320
      %v3322 = vpop.f32.mrb[0].mxu0
      %v3323 = vpop.f32.mrb[0].mxu0
      %v3324 = vadd.f32 %v3211, %v3323
      %v3325 = vpop.f32.mrb[0].mxu0
      %3326 = vmatprep.mubr.bf16.mxu0 0
      %3327 = vmatmul.mubr.bf16.gmra.mrb[0].mxu0 %v2672
      %v3328 = vpop.f32.mrb[0].mxu0
      %v3329 = vadd.f32 %v3216, %v3328
      %v3330 = vpop.f32.mrb[0].mxu0
      %v3331 = vpop.f32.mrb[0].mxu0
      %v3332 = vadd.f32 %v3219, %v3331
      %v3333 = vpop.f32.mrb[0].mxu0
      %3334 = vmatprep.mubr.bf16.mxu0 0
      %3335 = vmatmul.mubr.bf16.gmra.mrb[0].mxu0 %v2681
      %v3336 = vpop.f32.mrb[0].mxu0
      %v3337 = vadd.f32 %v3224, %v3336
      %v3338 = vpop.f32.mrb[0].mxu0
      %v3339 = vpop.f32.mrb[0].mxu0
      %v3340 = vadd.f32 %v3227, %v3339
      %v3341 = vpop.f32.mrb[0].mxu0
      %3342 = vmatprep.mubr.bf16.mxu0 0
      %3343 = vmatmul.mubr.bf16.gmra.mrb[0].mxu0 %v2690
      %v3344 = vpop.f32.mrb[0].mxu0
      %v3345 = vadd.f32 %v3232, %v3344
      %v3346 = vpop.f32.mrb[0].mxu0
      %v3347 = vpop.f32.mrb[0].mxu0
      %v3348 = vadd.f32 %v3235, %v3347
      %v3349 = vpop.f32.mrb[0].mxu0
      %3350 = vmatprep.mubr.bf16.mxu0 0
      %3351 = vmatmul.mubr.bf16.gmra.mrb[0].mxu0 %v2699
      %v3352 = vpop.f32.mrb[0].mxu0
      %v3353 = vadd.f32 %v3240, %v3352
      %v3354 = vpop.f32.mrb[0].mxu0
      %v3355 = vpop.f32.mrb[0].mxu0
      %v3356 = vadd.f32 %v3243, %v3355
      %v3357 = vpop.f32.mrb[0].mxu0
      %3358 = vmatprep.mubr.bf16.mxu0 0
      %3359 = vmatmul.mubr.bf16.gmra.mrb[0].mxu0 %v2708
      %v3360 = vpop.f32.mrb[0].mxu0
      %v3361 = vadd.f32 %v3248, %v3360
      %v3362 = vpop.f32.mrb[0].mxu0
      %v3363 = vpop.f32.mrb[0].mxu0
      %v3364 = vadd.f32 %v3251, %v3363
      %v3365 = vpop.f32.mrb[0].mxu0
      %3366 = vmatprep.mubr.bf16.mxu0 0
      %3367 = vmatmul.mubr.bf16.gmra.mrb[0].mxu0 %v2717
      %v3368 = vpop.f32.mrb[0].mxu0
      %v3369 = vadd.f32 %v3256, %v3368
      %v3370 = vpop.f32.mrb[0].mxu0
      %v3371 = vpop.f32.mrb[0].mxu0
      %v3372 = vadd.f32 %v3259, %v3371
      %v3373 = vpop.f32.mrb[0].mxu0
      %3374 = vmatprep.mubr.bf16.mxu0 0
      %3375 = vmatmul.mubr.bf16.gmra.mrb[0].mxu0 %v2726
      %v3376 = vpop.f32.mrb[0].mxu0
      %v3377 = vadd.f32 %v3264, %v3376
      %v3378 = vpop.f32.mrb[0].mxu0
      %v3379 = vpop.f32.mrb[0].mxu0
      %v3380 = vadd.f32 %v3267, %v3379
      %v3381 = vpop.f32.mrb[0].mxu0
      %3382 = vmatprep.mubr.bf16.mxu0 0
      %3383 = vmatmul.mubr.bf16.gmra.mrb[0].mxu0 %v2735
      %v3384 = vpop.f32.mrb[0].mxu0
      %v3385 = vadd.f32 %v3272, %v3384
      %v3386 = vpop.f32.mrb[0].mxu0
      %v3387 = vpop.f32.mrb[0].mxu0
      %v3388 = vadd.f32 %v3275, %v3387
      %v3389 = vpop.f32.mrb[0].mxu0
      %3390 = vdwg.mxu0
      %vm3391 = vcmask 400384
      %3392 = vst.msk [vmem:[%s175] sm:$0xff] %vm3391, %v3313
      %3393 = vst.msk [vmem:[%s175 + $0x8] sm:$0xff] %vm3391, %v3316
      %3394 = vst.msk [vmem:[%s175 + $0x10] sm:$0xff] %vm3391, %v3321
      %3395 = vst.msk [vmem:[%s175 + $0x18] sm:$0xff] %vm3391, %v3324
      %3396 = vst.msk [vmem:[%s175 + $0x20] sm:$0xff] %vm3391, %v3329
      %3397 = vst.msk [vmem:[%s175 + $0x28] sm:$0xff] %vm3391, %v3332
      %3398 = vst.msk [vmem:[%s175 + $0x30] sm:$0xff] %vm3391, %v3337
      %3399 = vst.msk [vmem:[%s175 + $0x38] sm:$0xff] %vm3391, %v3340
      %3400 = vst.msk [vmem:[%s175 + $0x40] sm:$0xff] %vm3391, %v3345
      %3401 = vst.msk [vmem:[%s175 + $0x48] sm:$0xff] %vm3391, %v3348
      %3402 = vst.msk [vmem:[%s175 + $0x50] sm:$0xff] %vm3391, %v3353
      %3403 = vst.msk [vmem:[%s175 + $0x58] sm:$0xff] %vm3391, %v3356
      %3404 = vst.msk [vmem:[%s175 + $0x60] sm:$0xff] %vm3391, %v3361
      %3405 = vst.msk [vmem:[%s175 + $0x68] sm:$0xff] %vm3391, %v3364
      %3406 = vst.msk [vmem:[%s175 + $0x70] sm:$0xff] %vm3391, %v3369
      %3407 = vst.msk [vmem:[%s175 + $0x78] sm:$0xff] %vm3391, %v3372
      %3408 = vst.msk [vmem:[%s175 + $0x80] sm:$0xff] %vm3391, %v3377
      %3409 = vst.msk [vmem:[%s175 + $0x88] sm:$0xff] %vm3391, %v3380
      %3410 = vst.msk [vmem:[%s175 + $0x90] sm:$0xff] %vm3391, %v3385
      %3411 = vst.msk [vmem:[%s175 + $0x98] sm:$0xff] %vm3391, %v3388
      %s3412 = smul.u32 20, %s14
      %p3413 = scmp.lt.s32.totalorder %s3412, 39
      %s3414 = scalar_select %p3413, %s3412, 39
      %s3415 = smul.addr %s3414, 8
      %s3416 = scalar_lea.vmem %s3, %s3415
      // Predicated region
      $region33: #{tpu_custom_call.1} parent=31 // pred_check
        %p3417 = pneg %p100
      $region34: #{tpu_custom_call.1} parent=31 // pred_check_branch
        %3419 = sbr.rel (%p3417) target = $region36
      $region35: #{tpu_custom_call.1} parent=31 // pred_region
        %s3420 = smul.u32 20, %s14
      $region36: #{tpu_custom_call.1} parent=31 // pred_fallthru
        _
    $region32: #{tpu_custom_call.1} parent=5 // pred_fallthru
      _
    %p3421 = scmp.le.s32.totalorder 2, %s9
    // Predicated region
    $region37: #{tpu_custom_call.1} parent=5 // pred_check
      %p3422 = pneg %p3421
    $region38: #{tpu_custom_call.1} parent=5 // pred_check_branch
      %3424 = sbr.rel (%p3422) target = $region40
    $region39: #{tpu_custom_call.1} parent=5 // pred_region
      %s3425 = ssub.s32 %s9, 2
      // Predicated region
      $region41: #{tpu_custom_call.1} parent=39 // pred_check
        %p3426 = pneg %p106
      $region42: #{tpu_custom_call.1} parent=39 // pred_check_branch
        %3428 = sbr.rel (%p3426) target = $region44
      $region43: #{tpu_custom_call.1} parent=39 // pred_region
        %s3429 = smul.u32 20, %s15
        %p3430 = scmp.lt.s32.totalorder %s3429, 39
        %s3431 = scalar_select %p3430, %s3429, 39
        %s3432 = smul.addr %s3431, 8
        %s3433 = scalar_lea.vmem %s3, %s3432
      $region44: #{tpu_custom_call.1} parent=39 // pred_fallthru
        _
    $region40: #{tpu_custom_call.1} parent=5 // pred_fallthru
      _
  $region6: #{tpu_custom_call.1} parent=0 // loop_footer
    %s13 = sadd.s32 1, %s9
  $region7: #{tpu_custom_call.1} parent=0 // loop_footer_branch
    %8 = sbr.rel target = $region3
  $region8: #{tpu_custom_call.1} parent=0 // loop_exit
    _

</llo_original>
